<compile_context>
chip_gen: v7x
topology: tpu7x:2x2x1
jax: 0.10.0
libtpu: 0.0.40
codegen_flags: <defaults>
</compile_context>

<pallas_src>
import math

import jax
import jax.numpy as jnp
from jax.experimental import pallas as pl
from jax.experimental.pallas import tpu as pltpu

_HIDDEN2 = 1242          # fixed intermediate width from the PyTorch module
_HIDDEN2_PAD = 1280      # padded to a multiple of 128 (lane-dense)
_MAX_BATCH_TILE = 256    # batch tile when B is large


def _mlp_kernel(x_ref, w1_ref, b1_ref, w2_ref, b2_ref, w3_ref, b3_ref, out_ref):
    """Fused fc1+relu -> fc2+relu -> fc3 -> log_softmax(axis=1).

    Inputs x and weights are bf16 (MXU-native); accumulation and the
    log-softmax reduction are f32. Dropout = identity (eval mode).
    """
    x = x_ref[...]  # bf16 [TB, IN]

    # fc1 + ReLU
    h1 = jnp.dot(x, w1_ref[...], preferred_element_type=jnp.float32) + b1_ref[...]
    h1 = jnp.maximum(h1, 0.0).astype(jnp.bfloat16)

    # fc2 + ReLU  (padded columns stay exactly 0: zero w2 cols + zero b2 pad)
    h2 = jnp.dot(h1, w2_ref[...], preferred_element_type=jnp.float32) + b2_ref[...]
    h2 = jnp.maximum(h2, 0.0).astype(jnp.bfloat16)

    # fc3  (padded w3 rows are zero, so padded h2 lanes contribute nothing)
    logits = jnp.dot(h2, w3_ref[...], preferred_element_type=jnp.float32) + b3_ref[...]

    # log_softmax along dim=1 (numerically stable, f32)
    m = jnp.max(logits, axis=-1, keepdims=True)
    shifted = logits - m
    lse = jnp.log(jnp.sum(jnp.exp(shifted), axis=-1, keepdims=True))
    out_ref[...] = (shifted - lse).astype(out_ref.dtype)


def model_classifier_forward(x_nchw, params):
    """x_nchw: [B, C, H, W] float32. Returns log-probabilities [B, outputs]."""
    w1, b1, w2, b2, w3, b3 = params  # w* are bf16 [in,out]; b* are f32 [1,out]
    B = x_nchw.shape[0]
    x2d = x_nchw.reshape(B, -1).astype(jnp.bfloat16)  # torch: x.view(B, -1)
    in_features = x2d.shape[1]
    outputs = w3.shape[1]

    # Batch tiling: single tile for small B, 256-row tiles (8-aligned) otherwise.
    tb = B if B <= _MAX_BATCH_TILE else _MAX_BATCH_TILE
    b_padded = ((B + tb - 1) // tb) * tb
    if b_padded != B:
        x2d = jnp.pad(x2d, ((0, b_padded - B), (0, 0)))
    grid = (b_padded // tb,)

    def full_spec(shape):
        # Whole-array block, same block for every grid step -> VMEM-resident.
        return pl.BlockSpec(shape, lambda i: (0, 0))

    out = pl.pallas_call(
        _mlp_kernel,
        out_shape=jax.ShapeDtypeStruct((b_padded, outputs), jnp.float32),
        grid=grid,
        in_specs=[
            pl.BlockSpec((tb, in_features), lambda i: (i, 0)),  # x tiles over batch
            full_spec(w1.shape), full_spec(b1.shape),
            full_spec(w2.shape), full_spec(b2.shape),
            full_spec(w3.shape), full_spec(b3.shape),
        ],
        out_specs=pl.BlockSpec((tb, outputs), lambda i: (i, 0)),
        compiler_params=pltpu.CompilerParams(
            dimension_semantics=("parallel",),
        ),
    )(x2d, w1, b1, w2, b2, w3, b3)
    return out[:B]


def init_params(key, input_units, hidden_units, outputs):
    """Deterministic init mimicking torch.nn.Linear (uniform +/- 1/sqrt(fan_in)).

    Weights are stored as [in_features, out_features] (transposed vs torch) and
    cast to bf16; the ragged 1242 dim is zero-padded to 1280. Biases stay f32.
    """
    dims = [(input_units, hidden_units), (hidden_units, _HIDDEN2), (_HIDDEN2, outputs)]
    raw = []
    for i, (fan_in, fan_out) in enumerate(dims):
        kw, kb = jax.random.split(jax.random.fold_in(key, i))
        bound = 1.0 / math.sqrt(fan_in)
        w = jax.random.uniform(kw, (fan_in, fan_out), jnp.float32, -bound, bound)
        b = jax.random.uniform(kb, (1, fan_out), jnp.float32, -bound, bound)
        raw += [w, b]
    w1, b1, w2, b2, w3, b3 = raw

    # Zero-pad 1242 -> 1280: extra w2 columns / b2 entries / w3 rows are zero,
    # so the padded lanes are exactly 0 after ReLU and contribute nothing.
    pad = _HIDDEN2_PAD - _HIDDEN2
    w2 = jnp.pad(w2, ((0, 0), (0, pad)))
    b2 = jnp.pad(b2, ((0, 0), (0, pad)))
    w3 = jnp.pad(w3, ((0, pad), (0, 0)))

    w1, w2, w3 = (w.astype(jnp.bfloat16) for w in (w1, w2, w3))
    return w1, b1, w2, b2, w3, b3


if __name__ == "__main__":
    # Small shapes consistent with the module:
    #   x: [B=2, C=4, H=16, W=16] -> input_units = 4*16*16 = 1024
    #   hidden_units = 256, outputs = 10, fixed intermediate = 1242 (padded 1280)
    B, C, H, W = 2, 4, 16, 16
    input_units = C * H * W
    hidden_units = 256
    outputs = 10

    key = jax.random.PRNGKey(0)
    kx, kp = jax.random.split(key)
    x = jax.random.normal(kx, (B, C, H, W), dtype=jnp.float32)
    params = init_params(kp, input_units, hidden_units, outputs)

    log_probs = model_classifier_forward(x, params)
    jax.block_until_ready(log_probs)

    # sanity: log_softmax rows should sum (in prob space) to ~1
    assert log_probs.shape == (B, outputs)
    row_sums = jnp.sum(jnp.exp(log_probs), axis=1)
    assert bool(jnp.all(jnp.abs(row_sums - 1.0) < 1e-4))

    print("KERNEL_OK")
</pallas_src>

<mosaic_0001>
module attributes {stable_mosaic.version = 11 : i64} {
  func.func @_mlp_kernel(%arg0: i32, %arg1: memref<2x1024xbf16, #tpu.memory_space<vmem>>, %arg2: memref<1024x256xbf16, #tpu.memory_space<vmem>>, %arg3: memref<1x256xf32, #tpu.memory_space<vmem>>, %arg4: memref<256x1280xbf16, #tpu.memory_space<vmem>>, %arg5: memref<1x1280xf32, #tpu.memory_space<vmem>>, %arg6: memref<1280x10xbf16, #tpu.memory_space<vmem>>, %arg7: memref<1x10xf32, #tpu.memory_space<vmem>>, %arg8: memref<2x10xf32, #tpu.memory_space<vmem>>) attributes {dimension_semantics = [#tpu.dimension_semantics<parallel>], iteration_bounds = array<i64: 1>, scalar_prefetch = 0 : i64, scratch_operands = 0 : i64, tpu.core_type = #tpu.core_type<tc>, window_params = [{transform_indices = @transform_0, window_bounds = array<i64: 2, 1024>}, {pipeline_mode = #tpu.pipeline_mode<synchronous>, transform_indices = @transform_1, window_bounds = array<i64: 1024, 256>}, {pipeline_mode = #tpu.pipeline_mode<synchronous>, transform_indices = @transform_2, window_bounds = array<i64: 1, 256>}, {pipeline_mode = #tpu.pipeline_mode<synchronous>, transform_indices = @transform_3, window_bounds = array<i64: 256, 1280>}, {pipeline_mode = #tpu.pipeline_mode<synchronous>, transform_indices = @transform_4, window_bounds = array<i64: 1, 1280>}, {pipeline_mode = #tpu.pipeline_mode<synchronous>, transform_indices = @transform_5, window_bounds = array<i64: 1280, 10>}, {pipeline_mode = #tpu.pipeline_mode<synchronous>, transform_indices = @transform_6, window_bounds = array<i64: 1, 10>}, {transform_indices = @transform_7, window_bounds = array<i64: 2, 10>}]} {
    %c0 = arith.constant 0 : index
    %c0_0 = arith.constant 0 : index
    %0 = vector.load %arg1[%c0, %c0_0] : memref<2x1024xbf16, #tpu.memory_space<vmem>>, vector<2x1024xbf16>
    %c0_1 = arith.constant 0 : index
    %c0_2 = arith.constant 0 : index
    %1 = vector.load %arg2[%c0_1, %c0_2] : memref<1024x256xbf16, #tpu.memory_space<vmem>>, vector<1024x256xbf16>
    %cst = arith.constant dense<0.000000e+00> : vector<2x256xf32>
    %2 = tpu.matmul %0, %1, %cst {dimension_numbers = #tpu.dot_dimension_numbers<[1], [0], [0], [1], [0, 0, 1, 1], [], []>} : vector<2x1024xbf16>, vector<1024x256xbf16>, vector<2x256xf32> -> vector<2x256xf32>
    %c0_3 = arith.constant 0 : index
    %c0_4 = arith.constant 0 : index
    %3 = vector.load %arg3[%c0_3, %c0_4] : memref<1x256xf32, #tpu.memory_space<vmem>>, vector<1x256xf32>
    %4 = vector.broadcast %3 : vector<1x256xf32> to vector<2x256xf32>
    %5 = arith.addf %2, %4 : vector<2x256xf32>
    %cst_5 = arith.constant 0.000000e+00 : f32
    %6 = vector.broadcast %cst_5 : f32 to vector<2x256xf32>
    %7 = arith.maximumf %5, %6 : vector<2x256xf32>
    %8 = arith.truncf %7 : vector<2x256xf32> to vector<2x256xbf16>
    %c0_6 = arith.constant 0 : index
    %c0_7 = arith.constant 0 : index
    %9 = vector.load %arg4[%c0_6, %c0_7] : memref<256x1280xbf16, #tpu.memory_space<vmem>>, vector<256x1280xbf16>
    %cst_8 = arith.constant dense<0.000000e+00> : vector<2x1280xf32>
    %10 = tpu.matmul %8, %9, %cst_8 {dimension_numbers = #tpu.dot_dimension_numbers<[1], [0], [0], [1], [0, 0, 1, 1], [], []>} : vector<2x256xbf16>, vector<256x1280xbf16>, vector<2x1280xf32> -> vector<2x1280xf32>
    %c0_9 = arith.constant 0 : index
    %c0_10 = arith.constant 0 : index
    %11 = vector.load %arg5[%c0_9, %c0_10] : memref<1x1280xf32, #tpu.memory_space<vmem>>, vector<1x1280xf32>
    %12 = vector.broadcast %11 : vector<1x1280xf32> to vector<2x1280xf32>
    %13 = arith.addf %10, %12 : vector<2x1280xf32>
    %cst_11 = arith.constant 0.000000e+00 : f32
    %14 = vector.broadcast %cst_11 : f32 to vector<2x1280xf32>
    %15 = arith.maximumf %13, %14 : vector<2x1280xf32>
    %16 = arith.truncf %15 : vector<2x1280xf32> to vector<2x1280xbf16>
    %c0_12 = arith.constant 0 : index
    %c0_13 = arith.constant 0 : index
    %17 = vector.load %arg6[%c0_12, %c0_13] : memref<1280x10xbf16, #tpu.memory_space<vmem>>, vector<1280x10xbf16>
    %cst_14 = arith.constant dense<0.000000e+00> : vector<2x10xf32>
    %18 = tpu.matmul %16, %17, %cst_14 {dimension_numbers = #tpu.dot_dimension_numbers<[1], [0], [0], [1], [0, 0, 1, 1], [], []>} : vector<2x1280xbf16>, vector<1280x10xbf16>, vector<2x10xf32> -> vector<2x10xf32>
    %c0_15 = arith.constant 0 : index
    %c0_16 = arith.constant 0 : index
    %19 = vector.load %arg7[%c0_15, %c0_16] : memref<1x10xf32, #tpu.memory_space<vmem>>, vector<1x10xf32>
    %20 = vector.broadcast %19 : vector<1x10xf32> to vector<2x10xf32>
    %21 = arith.addf %18, %20 : vector<2x10xf32>
    %cst_17 = arith.constant dense<0xFF800000> : vector<2xf32>
    %22 = vector.multi_reduction <maximumf>, %21, %cst_17 [1] : vector<2x10xf32> to vector<2xf32>
    %23 = vector.shape_cast %22 : vector<2xf32> to vector<2x1xf32>
    %24 = vector.broadcast %23 : vector<2x1xf32> to vector<2x10xf32>
    %25 = arith.subf %21, %24 : vector<2x10xf32>
    %26 = math.exp %25 : vector<2x10xf32>
    %cst_18 = arith.constant dense<0.000000e+00> : vector<2xf32>
    %27 = vector.multi_reduction <add>, %26, %cst_18 [1] : vector<2x10xf32> to vector<2xf32>
    %28 = vector.shape_cast %27 : vector<2xf32> to vector<2x1xf32>
    %29 = math.log %28 : vector<2x1xf32>
    %30 = vector.broadcast %29 : vector<2x1xf32> to vector<2x10xf32>
    %31 = arith.subf %25, %30 : vector<2x10xf32>
    %c0_19 = arith.constant 0 : index
    %c0_20 = arith.constant 0 : index
    %32 = vector.load %arg8[%c0_19, %c0_20] : memref<2x10xf32, #tpu.memory_space<vmem>>, vector<2x10xf32>
    tpu.vector_store %arg8[%c0_19, %c0_20], %31 {strides = array<i32>} : memref<2x10xf32, #tpu.memory_space<vmem>>, vector<2x10xf32>,
    return
  }
  func.func @transform_0(%arg0: i32) -> (i32, i32) {
    %c0_i32 = arith.constant 0 : i32
    %c0_i32_0 = arith.constant 0 : i32
    return %arg0, %c0_i32 : i32, i32
  }
  func.func @transform_1(%arg0: i32) -> (i32, i32) {
    %c0_i32 = arith.constant 0 : i32
    %c0_i32_0 = arith.constant 0 : i32
    %c0_i32_1 = arith.constant 0 : i32
    return %c0_i32, %c0_i32_0 : i32, i32
  }
  func.func @transform_2(%arg0: i32) -> (i32, i32) {
    %c0_i32 = arith.constant 0 : i32
    %c0_i32_0 = arith.constant 0 : i32
    %c0_i32_1 = arith.constant 0 : i32
    return %c0_i32, %c0_i32_0 : i32, i32
  }
  func.func @transform_3(%arg0: i32) -> (i32, i32) {
    %c0_i32 = arith.constant 0 : i32
    %c0_i32_0 = arith.constant 0 : i32
    %c0_i32_1 = arith.constant 0 : i32
    return %c0_i32, %c0_i32_0 : i32, i32
  }
  func.func @transform_4(%arg0: i32) -> (i32, i32) {
    %c0_i32 = arith.constant 0 : i32
    %c0_i32_0 = arith.constant 0 : i32
    %c0_i32_1 = arith.constant 0 : i32
    return %c0_i32, %c0_i32_0 : i32, i32
  }
  func.func @transform_5(%arg0: i32) -> (i32, i32) {
    %c0_i32 = arith.constant 0 : i32
    %c0_i32_0 = arith.constant 0 : i32
    %c0_i32_1 = arith.constant 0 : i32
    return %c0_i32, %c0_i32_0 : i32, i32
  }
  func.func @transform_6(%arg0: i32) -> (i32, i32) {
    %c0_i32 = arith.constant 0 : i32
    %c0_i32_0 = arith.constant 0 : i32
    %c0_i32_1 = arith.constant 0 : i32
    return %c0_i32, %c0_i32_0 : i32, i32
  }
  func.func @transform_7(%arg0: i32) -> (i32, i32) {
    %c0_i32 = arith.constant 0 : i32
    %c0_i32_0 = arith.constant 0 : i32
    return %arg0, %c0_i32 : i32, i32
  }
}

</mosaic_0001>

<llo_original>
// kernel: tpu_custom_call.1
$region0: #{tpu_custom_call.1}
  #allocation0 [shape = 'u32[]', space=smem, size = 0x4, offset = 0x4, fixed_abs, tag = 'smem constant byte address 0x4 - core index']
  #allocation1 [shape = 'u32[144,128]{1,0:T(1,128)}', space=vmem, size = 0x12000, scoped, tag = 'internal scratch']
  %s0 = inlined_call_operand.vmem [shape: bf16[2,1024], index: 0, kind: input, shape index: {}]
  %s1 = inlined_call_operand.hbm [shape: bf16[1024,256], index: 1, kind: input, shape index: {}]
  %s2 = inlined_call_operand.vmem [shape: f32[1,256], index: 2, kind: input, shape index: {}]
  %s3 = inlined_call_operand.hbm [shape: bf16[256,1280], index: 3, kind: input, shape index: {}]
  %s4 = inlined_call_operand.vmem [shape: f32[1,1280], index: 4, kind: input, shape index: {}]
  %s5 = inlined_call_operand.vmem [shape: bf16[1280,10], index: 5, kind: input, shape index: {}]
  %s6 = inlined_call_operand.vmem [shape: f32[1,10], index: 6, kind: input, shape index: {}]
  %s7 = inlined_call_operand.hbm [shape: f32[2,10], index: 7, kind: output, shape index: {}]
  %s8 = sld [smem:[#allocation0]]
  $region46: #{tpu_custom_call.1} parent=0
    _
  %s10 = ssub.s32 1, %s8
  %s11 = scalar_select 0, %s10, %s8
  $region1: #{tpu_custom_call.1} parent=0
    #allocation2 [shape = 'u8[524288]{0}', space=vmem, size = 0x80000, scoped, tag = 'input window, operand 1, single buffered']
    #allocation3 [shape = 's32[1]{0}', space=sflag, size = 0x4, scoped, tag = 'scoped memory for tpu_custom_call.1']
    #allocation4 [shape = 's32[1]{0}', space=sflag, size = 0x4, scoped, tag = 'scoped memory for tpu_custom_call.1']
    #allocation5 [shape = 'u8[655360]{0}', space=vmem, size = 0xa0000, scoped, tag = 'input window, operand 3, single buffered']
    #allocation6 [shape = 's32[1]{0}', space=sflag, size = 0x4, scoped, tag = 'scoped memory for tpu_custom_call.1']
    #allocation7 [shape = 'u8[1024]{0}', space=vmem, size = 0x400, scoped, tag = 'output window, operand 0, single buffered']
    %12 = vsyncpa [#allocation3], 0
    %13 = vsyncpa [#allocation6], 0
    %14 = vsyncpa [#allocation4], 0
    // Predicated region
    $region2: #{tpu_custom_call.1} parent=1 // pred_check
      _
    $region3: #{tpu_custom_call.1} parent=1 // pred_check_branch
      %16 = sbr.rel (0) target = $region5
    $region4: #{tpu_custom_call.1} parent=1 // pred_region
      _
    $region5: #{tpu_custom_call.1} parent=1 // pred_fallthru
      _
    // Predicated region
    $region6: #{tpu_custom_call.1} parent=1 // pred_check
      _
    $region7: #{tpu_custom_call.1} parent=1 // pred_check_branch
      %18 = sbr.rel (0) target = $region9
    $region8: #{tpu_custom_call.1} parent=1 // pred_region
      %s20 = ssub.s32 16384, 16384
      %21 = vsyncadd [#allocation3], %s20
      %s22 = sshll.u32 [#allocation2], 4
      %s23 = int_to_ptr.vmem [resolvable:$true] %s22
      %28 = dma.hbm_to_vmem [thread:$0]  %s1, 16384, %s23, [#allocation3], 128, 128, 8
    $region9: #{tpu_custom_call.1} parent=1 // pred_fallthru
      _
    // Predicated region
    $region10: #{tpu_custom_call.1} parent=1 // pred_check
      _
    $region11: #{tpu_custom_call.1} parent=1 // pred_check_branch
      %30 = sbr.rel (0) target = $region13
    $region12: #{tpu_custom_call.1} parent=1 // pred_region
      _
    $region13: #{tpu_custom_call.1} parent=1 // pred_fallthru
      _
    // Predicated region
    $region14: #{tpu_custom_call.1} parent=1 // pred_check
      _
    $region15: #{tpu_custom_call.1} parent=1 // pred_check_branch
      %32 = sbr.rel (0) target = $region17
    $region16: #{tpu_custom_call.1} parent=1 // pred_region
      %s34 = ssub.s32 20480, 20480
      %35 = vsyncadd [#allocation6], %s34
      %s36 = sshll.u32 [#allocation5], 4
      %s37 = int_to_ptr.vmem [resolvable:$true] %s36
      %42 = dma.hbm_to_vmem [thread:$0]  %s3, 20480, %s37, [#allocation6], 640, 640, 40
    $region17: #{tpu_custom_call.1} parent=1 // pred_fallthru
      _
    // Predicated region
    $region18: #{tpu_custom_call.1} parent=1 // pred_check
      _
    $region19: #{tpu_custom_call.1} parent=1 // pred_check_branch
      %44 = sbr.rel (0) target = $region21
    $region20: #{tpu_custom_call.1} parent=1 // pred_region
      _
    $region21: #{tpu_custom_call.1} parent=1 // pred_fallthru
      _
    // Predicated region
    $region22: #{tpu_custom_call.1} parent=1 // pred_check
      _
    $region23: #{tpu_custom_call.1} parent=1 // pred_check_branch
      %46 = sbr.rel (0) target = $region25
    $region24: #{tpu_custom_call.1} parent=1 // pred_region
      _
    $region25: #{tpu_custom_call.1} parent=1 // pred_fallthru
      _
    // Predicated region
    $region26: #{tpu_custom_call.1} parent=1 // pred_check
      _
    $region27: #{tpu_custom_call.1} parent=1 // pred_check_branch
      %48 = sbr.rel (0) target = $region29
    $region28: #{tpu_custom_call.1} parent=1 // pred_region
      _
    $region29: #{tpu_custom_call.1} parent=1 // pred_fallthru
      _
    // Predicated region
    $region30: #{tpu_custom_call.1} parent=1 // pred_check
      _
    $region31: #{tpu_custom_call.1} parent=1 // pred_check_branch
      %50 = sbr.rel (0) target = $region33
    $region32: #{tpu_custom_call.1} parent=1 // pred_region
      %51 = dma.done [#allocation3], 16384
    $region33: #{tpu_custom_call.1} parent=1 // pred_fallthru
      _
    // Predicated region
    $region34: #{tpu_custom_call.1} parent=1 // pred_check
      _
    $region35: #{tpu_custom_call.1} parent=1 // pred_check_branch
      %53 = sbr.rel (0) target = $region37
    $region36: #{tpu_custom_call.1} parent=1 // pred_region
      %54 = dma.done [#allocation6], 20480
    $region37: #{tpu_custom_call.1} parent=1 // pred_fallthru
      _
    %v56 = vld [vmem:[%s0] sm:$0xff]
    %v57 = vld [vmem:[#allocation2] sm:$0xff]
    %v58 = vld [vmem:[#allocation2 + $0x8] sm:$0xff]
    %v59 = vld [vmem:[#allocation2 + $0x10] sm:$0xff]
    %v60 = vld [vmem:[#allocation2 + $0x18] sm:$0xff]
    %v61 = vld [vmem:[#allocation2 + $0x20] sm:$0xff]
    %v62 = vld [vmem:[#allocation2 + $0x28] sm:$0xff]
    %v63 = vld [vmem:[#allocation2 + $0x30] sm:$0xff]
    %v64 = vld [vmem:[#allocation2 + $0x38] sm:$0xff]
    %v65 = vld [vmem:[#allocation2 + $0x40] sm:$0xff]
    %v66 = vld [vmem:[#allocation2 + $0x48] sm:$0xff]
    %v67 = vld [vmem:[#allocation2 + $0x50] sm:$0xff]
    %v68 = vld [vmem:[#allocation2 + $0x58] sm:$0xff]
    %v69 = vld [vmem:[#allocation2 + $0x60] sm:$0xff]
    %v70 = vld [vmem:[#allocation2 + $0x68] sm:$0xff]
    %v71 = vld [vmem:[#allocation2 + $0x70] sm:$0xff]
    %v72 = vld [vmem:[#allocation2 + $0x78] sm:$0xff]
    %v73 = vld [vmem:[#allocation2 + $0x80] sm:$0xff]
    %v74 = vld [vmem:[#allocation2 + $0x88] sm:$0xff]
    %v75 = vld [vmem:[#allocation2 + $0x90] sm:$0xff]
    %v76 = vld [vmem:[#allocation2 + $0x98] sm:$0xff]
    %v77 = vld [vmem:[#allocation2 + $0xa0] sm:$0xff]
    %v78 = vld [vmem:[#allocation2 + $0xa8] sm:$0xff]
    %v79 = vld [vmem:[#allocation2 + $0xb0] sm:$0xff]
    %v80 = vld [vmem:[#allocation2 + $0xb8] sm:$0xff]
    %v81 = vld [vmem:[#allocation2 + $0xc0] sm:$0xff]
    %v82 = vld [vmem:[#allocation2 + $0xc8] sm:$0xff]
    %v83 = vld [vmem:[#allocation2 + $0xd0] sm:$0xff]
    %v84 = vld [vmem:[#allocation2 + $0xd8] sm:$0xff]
    %v85 = vld [vmem:[#allocation2 + $0xe0] sm:$0xff]
    %v86 = vld [vmem:[#allocation2 + $0xe8] sm:$0xff]
    %v87 = vld [vmem:[#allocation2 + $0xf0] sm:$0xff]
    %v88 = vld [vmem:[#allocation2 + $0xf8] sm:$0xff]
    %v89 = vld [vmem:[#allocation2 + $0x100] sm:$0xff]
    %v90 = vld [vmem:[#allocation2 + $0x108] sm:$0xff]
    %v91 = vld [vmem:[#allocation2 + $0x110] sm:$0xff]
    %v92 = vld [vmem:[#allocation2 + $0x118] sm:$0xff]
    %v93 = vld [vmem:[#allocation2 + $0x120] sm:$0xff]
    %v94 = vld [vmem:[#allocation2 + $0x128] sm:$0xff]
    %v95 = vld [vmem:[#allocation2 + $0x130] sm:$0xff]
    %v96 = vld [vmem:[#allocation2 + $0x138] sm:$0xff]
    %v97 = vld [vmem:[#allocation2 + $0x140] sm:$0xff]
    %v98 = vld [vmem:[#allocation2 + $0x148] sm:$0xff]
    %v99 = vld [vmem:[#allocation2 + $0x150] sm:$0xff]
    %v100 = vld [vmem:[#allocation2 + $0x158] sm:$0xff]
    %v101 = vld [vmem:[#allocation2 + $0x160] sm:$0xff]
    %v102 = vld [vmem:[#allocation2 + $0x168] sm:$0xff]
    %v103 = vld [vmem:[#allocation2 + $0x170] sm:$0xff]
    %v104 = vld [vmem:[#allocation2 + $0x178] sm:$0xff]
    %v105 = vld [vmem:[#allocation2 + $0x180] sm:$0xff]
    %v106 = vld [vmem:[#allocation2 + $0x188] sm:$0xff]
    %v107 = vld [vmem:[#allocation2 + $0x190] sm:$0xff]
    %v108 = vld [vmem:[#allocation2 + $0x198] sm:$0xff]
    %v109 = vld [vmem:[#allocation2 + $0x1a0] sm:$0xff]
    %v110 = vld [vmem:[#allocation2 + $0x1a8] sm:$0xff]
    %v111 = vld [vmem:[#allocation2 + $0x1b0] sm:$0xff]
    %v112 = vld [vmem:[#allocation2 + $0x1b8] sm:$0xff]
    %v113 = vld [vmem:[#allocation2 + $0x1c0] sm:$0xff]
    %v114 = vld [vmem:[#allocation2 + $0x1c8] sm:$0xff]
    %v115 = vld [vmem:[#allocation2 + $0x1d0] sm:$0xff]
    %v116 = vld [vmem:[#allocation2 + $0x1d8] sm:$0xff]
    %v117 = vld [vmem:[#allocation2 + $0x1e0] sm:$0xff]
    %v118 = vld [vmem:[#allocation2 + $0x1e8] sm:$0xff]
    %v119 = vld [vmem:[#allocation2 + $0x1f0] sm:$0xff]
    %v120 = vld [vmem:[#allocation2 + $0x1f8] sm:$0xff]
    %v121 = vld [vmem:[#allocation2 + $0x200] sm:$0xff]
    %v122 = vld [vmem:[#allocation2 + $0x208] sm:$0xff]
    %v123 = vld [vmem:[#allocation2 + $0x210] sm:$0xff]
    %v124 = vld [vmem:[#allocation2 + $0x218] sm:$0xff]
    %v125 = vld [vmem:[#allocation2 + $0x220] sm:$0xff]
    %v126 = vld [vmem:[#allocation2 + $0x228] sm:$0xff]
    %v127 = vld [vmem:[#allocation2 + $0x230] sm:$0xff]
    %v128 = vld [vmem:[#allocation2 + $0x238] sm:$0xff]
    %v129 = vld [vmem:[#allocation2 + $0x240] sm:$0xff]
    %v130 = vld [vmem:[#allocation2 + $0x248] sm:$0xff]
    %v131 = vld [vmem:[#allocation2 + $0x250] sm:$0xff]
    %v132 = vld [vmem:[#allocation2 + $0x258] sm:$0xff]
    %v133 = vld [vmem:[#allocation2 + $0x260] sm:$0xff]
    %v134 = vld [vmem:[#allocation2 + $0x268] sm:$0xff]
    %v135 = vld [vmem:[#allocation2 + $0x270] sm:$0xff]
    %v136 = vld [vmem:[#allocation2 + $0x278] sm:$0xff]
    %v137 = vld [vmem:[#allocation2 + $0x280] sm:$0xff]
    %v138 = vld [vmem:[#allocation2 + $0x288] sm:$0xff]
    %v139 = vld [vmem:[#allocation2 + $0x290] sm:$0xff]
    %v140 = vld [vmem:[#allocation2 + $0x298] sm:$0xff]
    %v141 = vld [vmem:[#allocation2 + $0x2a0] sm:$0xff]
    %v142 = vld [vmem:[#allocation2 + $0x2a8] sm:$0xff]
    %v143 = vld [vmem:[#allocation2 + $0x2b0] sm:$0xff]
    %v144 = vld [vmem:[#allocation2 + $0x2b8] sm:$0xff]
    %v145 = vld [vmem:[#allocation2 + $0x2c0] sm:$0xff]
    %v146 = vld [vmem:[#allocation2 + $0x2c8] sm:$0xff]
    %v147 = vld [vmem:[#allocation2 + $0x2d0] sm:$0xff]
    %v148 = vld [vmem:[#allocation2 + $0x2d8] sm:$0xff]
    %v149 = vld [vmem:[#allocation2 + $0x2e0] sm:$0xff]
    %v150 = vld [vmem:[#allocation2 + $0x2e8] sm:$0xff]
    %v151 = vld [vmem:[#allocation2 + $0x2f0] sm:$0xff]
    %v152 = vld [vmem:[#allocation2 + $0x2f8] sm:$0xff]
    %v153 = vld [vmem:[#allocation2 + $0x300] sm:$0xff]
    %v154 = vld [vmem:[#allocation2 + $0x308] sm:$0xff]
    %v155 = vld [vmem:[#allocation2 + $0x310] sm:$0xff]
    %v156 = vld [vmem:[#allocation2 + $0x318] sm:$0xff]
    %v157 = vld [vmem:[#allocation2 + $0x320] sm:$0xff]
    %v158 = vld [vmem:[#allocation2 + $0x328] sm:$0xff]
    %v159 = vld [vmem:[#allocation2 + $0x330] sm:$0xff]
    %v160 = vld [vmem:[#allocation2 + $0x338] sm:$0xff]
    %v161 = vld [vmem:[#allocation2 + $0x340] sm:$0xff]
    %v162 = vld [vmem:[#allocation2 + $0x348] sm:$0xff]
    %v163 = vld [vmem:[#allocation2 + $0x350] sm:$0xff]
    %v164 = vld [vmem:[#allocation2 + $0x358] sm:$0xff]
    %v165 = vld [vmem:[#allocation2 + $0x360] sm:$0xff]
    %v166 = vld [vmem:[#allocation2 + $0x368] sm:$0xff]
    %v167 = vld [vmem:[#allocation2 + $0x370] sm:$0xff]
    %v168 = vld [vmem:[#allocation2 + $0x378] sm:$0xff]
    %v169 = vld [vmem:[#allocation2 + $0x380] sm:$0xff]
    %v170 = vld [vmem:[#allocation2 + $0x388] sm:$0xff]
    %v171 = vld [vmem:[#allocation2 + $0x390] sm:$0xff]
    %v172 = vld [vmem:[#allocation2 + $0x398] sm:$0xff]
    %v173 = vld [vmem:[#allocation2 + $0x3a0] sm:$0xff]
    %v174 = vld [vmem:[#allocation2 + $0x3a8] sm:$0xff]
    %v175 = vld [vmem:[#allocation2 + $0x3b0] sm:$0xff]
    %v176 = vld [vmem:[#allocation2 + $0x3b8] sm:$0xff]
    %v177 = vld [vmem:[#allocation2 + $0x3c0] sm:$0xff]
    %v178 = vld [vmem:[#allocation2 + $0x3c8] sm:$0xff]
    %v179 = vld [vmem:[#allocation2 + $0x3d0] sm:$0xff]
    %v180 = vld [vmem:[#allocation2 + $0x3d8] sm:$0xff]
    %v181 = vld [vmem:[#allocation2 + $0x3e0] sm:$0xff]
    %v182 = vld [vmem:[#allocation2 + $0x3e8] sm:$0xff]
    %v183 = vld [vmem:[#allocation2 + $0x3f0] sm:$0xff]
    %v184 = vld [vmem:[#allocation2 + $0x3f8] sm:$0xff]
    %v185 = vld [vmem:[%s2] sm:$0x3]
    %v187 = vlaneseq
    %v188 = vshrl.u32 %v187, 7
    %v189 = vsub.s32 0, %v188
    %v190 = vrot.slane %v185, %v189
    %v191 = vlaneseq
    %v192 = vshrl.u32 %v191, 7
    %v193 = vsub.s32 1, %v192
    %v194 = vrot.slane %v185, %v193
    %v198 = vcombine.high %v56, %v56
    %v200 = vunpack.c.l.s4 1966171168
    %v201 = vunpack.c.0.s8 %v200
    %v202 = vlaneseq
    %v203 = vshrl.u32 %v202, 7
    %v204 = vsub.s32 %v201, %v203
    %v205 = vrot.slane %v56, %v204
    %v207 = vunpack.c.l.s4 1966171168
    %v208 = vunpack.c.0.s8 %v207
    %v209 = vlaneseq
    %v210 = vshrl.u32 %v209, 7
    %v211 = vsub.s32 %v208, %v210
    %v212 = vrot.slane %v198, %v211
    %v213 = vcombine.high %v205, %v205
    %v214 = vcombine.high %v212, %v212
    %v216 = vunpack.c.l.s4 1966171168
    %v217 = vunpack.c.0.s8 %v216
    %v218 = vlaneseq
    %v219 = vshrl.u32 %v218, 7
    %v220 = vsub.s32 %v217, %v219
    %v221 = vrot.slane %v205, %v220
    %v223 = vunpack.c.l.s4 1966171168
    %v224 = vunpack.c.0.s8 %v223
    %v225 = vlaneseq
    %v226 = vshrl.u32 %v225, 7
    %v227 = vsub.s32 %v224, %v226
    %v228 = vrot.slane %v212, %v227
    %v230 = vunpack.c.l.s4 1966171168
    %v231 = vunpack.c.0.s8 %v230
    %v232 = vlaneseq
    %v233 = vshrl.u32 %v232, 7
    %v234 = vsub.s32 %v231, %v233
    %v235 = vrot.slane %v213, %v234
    %v237 = vunpack.c.l.s4 1966171168
    %v238 = vunpack.c.0.s8 %v237
    %v239 = vlaneseq
    %v240 = vshrl.u32 %v239, 7
    %v241 = vsub.s32 %v238, %v240
    %v242 = vrot.slane %v214, %v241
    %v243 = vcombine.high %v221, %v221
    %v244 = vcombine.high %v228, %v228
    %v245 = vcombine.high %v235, %v235
    %v246 = vcombine.high %v242, %v242
    %v383 = vunpack.c.l.b16 %v57
    %v384 = vunpack.c.h.b16 %v57
    %v385 = vunpack.c.l.b16 %v58
    %v386 = vunpack.c.h.b16 %v58
    %v387 = vunpack.c.l.b16 %v59
    %v388 = vunpack.c.h.b16 %v59
    %v389 = vunpack.c.l.b16 %v60
    %v390 = vunpack.c.h.b16 %v60
    %v391 = vunpack.c.l.b16 %v61
    %v392 = vunpack.c.h.b16 %v61
    %v393 = vunpack.c.l.b16 %v62
    %v394 = vunpack.c.h.b16 %v62
    %v395 = vunpack.c.l.b16 %v63
    %v396 = vunpack.c.h.b16 %v63
    %v397 = vunpack.c.l.b16 %v64
    %v398 = vunpack.c.h.b16 %v64
    %v399 = vunpack.c.l.b16 %v65
    %v400 = vunpack.c.h.b16 %v65
    %v401 = vunpack.c.l.b16 %v66
    %v402 = vunpack.c.h.b16 %v66
    %v403 = vunpack.c.l.b16 %v67
    %v404 = vunpack.c.h.b16 %v67
    %v405 = vunpack.c.l.b16 %v68
    %v406 = vunpack.c.h.b16 %v68
    %v407 = vunpack.c.l.b16 %v69
    %v408 = vunpack.c.h.b16 %v69
    %v409 = vunpack.c.l.b16 %v70
    %v410 = vunpack.c.h.b16 %v70
    %v411 = vunpack.c.l.b16 %v71
    %v412 = vunpack.c.h.b16 %v71
    %v413 = vunpack.c.l.b16 %v72
    %v414 = vunpack.c.h.b16 %v72
    %v415 = vunpack.c.l.b16 %v73
    %v416 = vunpack.c.h.b16 %v73
    %v417 = vunpack.c.l.b16 %v74
    %v418 = vunpack.c.h.b16 %v74
    %v419 = vunpack.c.l.b16 %v75
    %v420 = vunpack.c.h.b16 %v75
    %v421 = vunpack.c.l.b16 %v76
    %v422 = vunpack.c.h.b16 %v76
    %v423 = vunpack.c.l.b16 %v77
    %v424 = vunpack.c.h.b16 %v77
    %v425 = vunpack.c.l.b16 %v78
    %v426 = vunpack.c.h.b16 %v78
    %v427 = vunpack.c.l.b16 %v79
    %v428 = vunpack.c.h.b16 %v79
    %v429 = vunpack.c.l.b16 %v80
    %v430 = vunpack.c.h.b16 %v80
    %v431 = vunpack.c.l.b16 %v81
    %v432 = vunpack.c.h.b16 %v81
    %v433 = vunpack.c.l.b16 %v82
    %v434 = vunpack.c.h.b16 %v82
    %v435 = vunpack.c.l.b16 %v83
    %v436 = vunpack.c.h.b16 %v83
    %v437 = vunpack.c.l.b16 %v84
    %v438 = vunpack.c.h.b16 %v84
    %v439 = vunpack.c.l.b16 %v85
    %v440 = vunpack.c.h.b16 %v85
    %v441 = vunpack.c.l.b16 %v86
    %v442 = vunpack.c.h.b16 %v86
    %v443 = vunpack.c.l.b16 %v87
    %v444 = vunpack.c.h.b16 %v87
    %v445 = vunpack.c.l.b16 %v88
    %v446 = vunpack.c.h.b16 %v88
    %v447 = vunpack.c.l.b16 %v89
    %v448 = vunpack.c.h.b16 %v89
    %v449 = vunpack.c.l.b16 %v90
    %v450 = vunpack.c.h.b16 %v90
    %v451 = vunpack.c.l.b16 %v91
    %v452 = vunpack.c.h.b16 %v91
    %v453 = vunpack.c.l.b16 %v92
    %v454 = vunpack.c.h.b16 %v92
    %v455 = vunpack.c.l.b16 %v93
    %v456 = vunpack.c.h.b16 %v93
    %v457 = vunpack.c.l.b16 %v94
    %v458 = vunpack.c.h.b16 %v94
    %v459 = vunpack.c.l.b16 %v95
    %v460 = vunpack.c.h.b16 %v95
    %v461 = vunpack.c.l.b16 %v96
    %v462 = vunpack.c.h.b16 %v96
    %v463 = vunpack.c.l.b16 %v97
    %v464 = vunpack.c.h.b16 %v97
    %v465 = vunpack.c.l.b16 %v98
    %v466 = vunpack.c.h.b16 %v98
    %v467 = vunpack.c.l.b16 %v99
    %v468 = vunpack.c.h.b16 %v99
    %v469 = vunpack.c.l.b16 %v100
    %v470 = vunpack.c.h.b16 %v100
    %v471 = vunpack.c.l.b16 %v101
    %v472 = vunpack.c.h.b16 %v101
    %v473 = vunpack.c.l.b16 %v102
    %v474 = vunpack.c.h.b16 %v102
    %v475 = vunpack.c.l.b16 %v103
    %v476 = vunpack.c.h.b16 %v103
    %v477 = vunpack.c.l.b16 %v104
    %v478 = vunpack.c.h.b16 %v104
    %v479 = vunpack.c.l.b16 %v105
    %v480 = vunpack.c.h.b16 %v105
    %v481 = vunpack.c.l.b16 %v106
    %v482 = vunpack.c.h.b16 %v106
    %v483 = vunpack.c.l.b16 %v107
    %v484 = vunpack.c.h.b16 %v107
    %v485 = vunpack.c.l.b16 %v108
    %v486 = vunpack.c.h.b16 %v108
    %v487 = vunpack.c.l.b16 %v109
    %v488 = vunpack.c.h.b16 %v109
    %v489 = vunpack.c.l.b16 %v110
    %v490 = vunpack.c.h.b16 %v110
    %v491 = vunpack.c.l.b16 %v111
    %v492 = vunpack.c.h.b16 %v111
    %v493 = vunpack.c.l.b16 %v112
    %v494 = vunpack.c.h.b16 %v112
    %v495 = vunpack.c.l.b16 %v113
    %v496 = vunpack.c.h.b16 %v113
    %v497 = vunpack.c.l.b16 %v114
    %v498 = vunpack.c.h.b16 %v114
    %v499 = vunpack.c.l.b16 %v115
    %v500 = vunpack.c.h.b16 %v115
    %v501 = vunpack.c.l.b16 %v116
    %v502 = vunpack.c.h.b16 %v116
    %v503 = vunpack.c.l.b16 %v117
    %v504 = vunpack.c.h.b16 %v117
    %v505 = vunpack.c.l.b16 %v118
    %v506 = vunpack.c.h.b16 %v118
    %v507 = vunpack.c.l.b16 %v119
    %v508 = vunpack.c.h.b16 %v119
    %v509 = vunpack.c.l.b16 %v120
    %v510 = vunpack.c.h.b16 %v120
    %v511 = vunpack.c.l.b16 %v121
    %v512 = vunpack.c.h.b16 %v121
    %v513 = vunpack.c.l.b16 %v122
    %v514 = vunpack.c.h.b16 %v122
    %v515 = vunpack.c.l.b16 %v123
    %v516 = vunpack.c.h.b16 %v123
    %v517 = vunpack.c.l.b16 %v124
    %v518 = vunpack.c.h.b16 %v124
    %v519 = vunpack.c.l.b16 %v125
    %v520 = vunpack.c.h.b16 %v125
    %v521 = vunpack.c.l.b16 %v126
    %v522 = vunpack.c.h.b16 %v126
    %v523 = vunpack.c.l.b16 %v127
    %v524 = vunpack.c.h.b16 %v127
    %v525 = vunpack.c.l.b16 %v128
    %v526 = vunpack.c.h.b16 %v128
    %v527 = vunpack.c.l.b16 %v129
    %v528 = vunpack.c.h.b16 %v129
    %v529 = vunpack.c.l.b16 %v130
    %v530 = vunpack.c.h.b16 %v130
    %v531 = vunpack.c.l.b16 %v131
    %v532 = vunpack.c.h.b16 %v131
    %v533 = vunpack.c.l.b16 %v132
    %v534 = vunpack.c.h.b16 %v132
    %v535 = vunpack.c.l.b16 %v133
    %v536 = vunpack.c.h.b16 %v133
    %v537 = vunpack.c.l.b16 %v134
    %v538 = vunpack.c.h.b16 %v134
    %v539 = vunpack.c.l.b16 %v135
    %v540 = vunpack.c.h.b16 %v135
    %v541 = vunpack.c.l.b16 %v136
    %v542 = vunpack.c.h.b16 %v136
    %v543 = vunpack.c.l.b16 %v137
    %v544 = vunpack.c.h.b16 %v137
    %v545 = vunpack.c.l.b16 %v138
    %v546 = vunpack.c.h.b16 %v138
    %v547 = vunpack.c.l.b16 %v139
    %v548 = vunpack.c.h.b16 %v139
    %v549 = vunpack.c.l.b16 %v140
    %v550 = vunpack.c.h.b16 %v140
    %v551 = vunpack.c.l.b16 %v141
    %v552 = vunpack.c.h.b16 %v141
    %v553 = vunpack.c.l.b16 %v142
    %v554 = vunpack.c.h.b16 %v142
    %v555 = vunpack.c.l.b16 %v143
    %v556 = vunpack.c.h.b16 %v143
    %v557 = vunpack.c.l.b16 %v144
    %v558 = vunpack.c.h.b16 %v144
    %v559 = vunpack.c.l.b16 %v145
    %v560 = vunpack.c.h.b16 %v145
    %v561 = vunpack.c.l.b16 %v146
    %v562 = vunpack.c.h.b16 %v146
    %v563 = vunpack.c.l.b16 %v147
    %v564 = vunpack.c.h.b16 %v147
    %v565 = vunpack.c.l.b16 %v148
    %v566 = vunpack.c.h.b16 %v148
    %v567 = vunpack.c.l.b16 %v149
    %v568 = vunpack.c.h.b16 %v149
    %v569 = vunpack.c.l.b16 %v150
    %v570 = vunpack.c.h.b16 %v150
    %v571 = vunpack.c.l.b16 %v151
    %v572 = vunpack.c.h.b16 %v151
    %v573 = vunpack.c.l.b16 %v152
    %v574 = vunpack.c.h.b16 %v152
    %v575 = vunpack.c.l.b16 %v153
    %v576 = vunpack.c.h.b16 %v153
    %v577 = vunpack.c.l.b16 %v154
    %v578 = vunpack.c.h.b16 %v154
    %v579 = vunpack.c.l.b16 %v155
    %v580 = vunpack.c.h.b16 %v155
    %v581 = vunpack.c.l.b16 %v156
    %v582 = vunpack.c.h.b16 %v156
    %v583 = vunpack.c.l.b16 %v157
    %v584 = vunpack.c.h.b16 %v157
    %v585 = vunpack.c.l.b16 %v158
    %v586 = vunpack.c.h.b16 %v158
    %v587 = vunpack.c.l.b16 %v159
    %v588 = vunpack.c.h.b16 %v159
    %v589 = vunpack.c.l.b16 %v160
    %v590 = vunpack.c.h.b16 %v160
    %v591 = vunpack.c.l.b16 %v161
    %v592 = vunpack.c.h.b16 %v161
    %v593 = vunpack.c.l.b16 %v162
    %v594 = vunpack.c.h.b16 %v162
    %v595 = vunpack.c.l.b16 %v163
    %v596 = vunpack.c.h.b16 %v163
    %v597 = vunpack.c.l.b16 %v164
    %v598 = vunpack.c.h.b16 %v164
    %v599 = vunpack.c.l.b16 %v165
    %v600 = vunpack.c.h.b16 %v165
    %v601 = vunpack.c.l.b16 %v166
    %v602 = vunpack.c.h.b16 %v166
    %v603 = vunpack.c.l.b16 %v167
    %v604 = vunpack.c.h.b16 %v167
    %v605 = vunpack.c.l.b16 %v168
    %v606 = vunpack.c.h.b16 %v168
    %v607 = vunpack.c.l.b16 %v169
    %v608 = vunpack.c.h.b16 %v169
    %v609 = vunpack.c.l.b16 %v170
    %v610 = vunpack.c.h.b16 %v170
    %v611 = vunpack.c.l.b16 %v171
    %v612 = vunpack.c.h.b16 %v171
    %v613 = vunpack.c.l.b16 %v172
    %v614 = vunpack.c.h.b16 %v172
    %v615 = vunpack.c.l.b16 %v173
    %v616 = vunpack.c.h.b16 %v173
    %v617 = vunpack.c.l.b16 %v174
    %v618 = vunpack.c.h.b16 %v174
    %v619 = vunpack.c.l.b16 %v175
    %v620 = vunpack.c.h.b16 %v175
    %v621 = vunpack.c.l.b16 %v176
    %v622 = vunpack.c.h.b16 %v176
    %v623 = vunpack.c.l.b16 %v177
    %v624 = vunpack.c.h.b16 %v177
    %v625 = vunpack.c.l.b16 %v178
    %v626 = vunpack.c.h.b16 %v178
    %v627 = vunpack.c.l.b16 %v179
    %v628 = vunpack.c.h.b16 %v179
    %v629 = vunpack.c.l.b16 %v180
    %v630 = vunpack.c.h.b16 %v180
    %v631 = vunpack.c.l.b16 %v181
    %v632 = vunpack.c.h.b16 %v181
    %v633 = vunpack.c.l.b16 %v182
    %v634 = vunpack.c.h.b16 %v182
    %v635 = vunpack.c.l.b16 %v183
    %v636 = vunpack.c.h.b16 %v183
    %v637 = vunpack.c.l.b16 %v184
    %v638 = vunpack.c.h.b16 %v184
    %v639 = vpack.c.b16 %v385, %v383
    %v640 = vpack.c.b16 %v386, %v384
    %v641 = vpack.c.b16 %v389, %v387
    %v642 = vpack.c.b16 %v390, %v388
    %v643 = vpack.c.b16 %v393, %v391
    %v644 = vpack.c.b16 %v394, %v392
    %v645 = vpack.c.b16 %v397, %v395
    %v646 = vpack.c.b16 %v398, %v396
    %v647 = vpack.c.b16 %v401, %v399
    %v648 = vpack.c.b16 %v402, %v400
    %v649 = vpack.c.b16 %v405, %v403
    %v650 = vpack.c.b16 %v406, %v404
    %v651 = vpack.c.b16 %v409, %v407
    %v652 = vpack.c.b16 %v410, %v408
    %v653 = vpack.c.b16 %v413, %v411
    %v654 = vpack.c.b16 %v414, %v412
    %v655 = vpack.c.b16 %v417, %v415
    %v656 = vpack.c.b16 %v418, %v416
    %v657 = vpack.c.b16 %v421, %v419
    %v658 = vpack.c.b16 %v422, %v420
    %v659 = vpack.c.b16 %v425, %v423
    %v660 = vpack.c.b16 %v426, %v424
    %v661 = vpack.c.b16 %v429, %v427
    %v662 = vpack.c.b16 %v430, %v428
    %v663 = vpack.c.b16 %v433, %v431
    %v664 = vpack.c.b16 %v434, %v432
    %v665 = vpack.c.b16 %v437, %v435
    %v666 = vpack.c.b16 %v438, %v436
    %v667 = vpack.c.b16 %v441, %v439
    %v668 = vpack.c.b16 %v442, %v440
    %v669 = vpack.c.b16 %v445, %v443
    %v670 = vpack.c.b16 %v446, %v444
    %v671 = vpack.c.b16 %v449, %v447
    %v672 = vpack.c.b16 %v450, %v448
    %v673 = vpack.c.b16 %v453, %v451
    %v674 = vpack.c.b16 %v454, %v452
    %v675 = vpack.c.b16 %v457, %v455
    %v676 = vpack.c.b16 %v458, %v456
    %v677 = vpack.c.b16 %v461, %v459
    %v678 = vpack.c.b16 %v462, %v460
    %v679 = vpack.c.b16 %v465, %v463
    %v680 = vpack.c.b16 %v466, %v464
    %v681 = vpack.c.b16 %v469, %v467
    %v682 = vpack.c.b16 %v470, %v468
    %v683 = vpack.c.b16 %v473, %v471
    %v684 = vpack.c.b16 %v474, %v472
    %v685 = vpack.c.b16 %v477, %v475
    %v686 = vpack.c.b16 %v478, %v476
    %v687 = vpack.c.b16 %v481, %v479
    %v688 = vpack.c.b16 %v482, %v480
    %v689 = vpack.c.b16 %v485, %v483
    %v690 = vpack.c.b16 %v486, %v484
    %v691 = vpack.c.b16 %v489, %v487
    %v692 = vpack.c.b16 %v490, %v488
    %v693 = vpack.c.b16 %v493, %v491
    %v694 = vpack.c.b16 %v494, %v492
    %v695 = vpack.c.b16 %v497, %v495
    %v696 = vpack.c.b16 %v498, %v496
    %v697 = vpack.c.b16 %v501, %v499
    %v698 = vpack.c.b16 %v502, %v500
    %v699 = vpack.c.b16 %v505, %v503
    %v700 = vpack.c.b16 %v506, %v504
    %v701 = vpack.c.b16 %v509, %v507
    %v702 = vpack.c.b16 %v510, %v508
    %v703 = vpack.c.b16 %v513, %v511
    %v704 = vpack.c.b16 %v514, %v512
    %v705 = vpack.c.b16 %v517, %v515
    %v706 = vpack.c.b16 %v518, %v516
    %v707 = vpack.c.b16 %v521, %v519
    %v708 = vpack.c.b16 %v522, %v520
    %v709 = vpack.c.b16 %v525, %v523
    %v710 = vpack.c.b16 %v526, %v524
    %v711 = vpack.c.b16 %v529, %v527
    %v712 = vpack.c.b16 %v530, %v528
    %v713 = vpack.c.b16 %v533, %v531
    %v714 = vpack.c.b16 %v534, %v532
    %v715 = vpack.c.b16 %v537, %v535
    %v716 = vpack.c.b16 %v538, %v536
    %v717 = vpack.c.b16 %v541, %v539
    %v718 = vpack.c.b16 %v542, %v540
    %v719 = vpack.c.b16 %v545, %v543
    %v720 = vpack.c.b16 %v546, %v544
    %v721 = vpack.c.b16 %v549, %v547
    %v722 = vpack.c.b16 %v550, %v548
    %v723 = vpack.c.b16 %v553, %v551
    %v724 = vpack.c.b16 %v554, %v552
    %v725 = vpack.c.b16 %v557, %v555
    %v726 = vpack.c.b16 %v558, %v556
    %v727 = vpack.c.b16 %v561, %v559
    %v728 = vpack.c.b16 %v562, %v560
    %v729 = vpack.c.b16 %v565, %v563
    %v730 = vpack.c.b16 %v566, %v564
    %v731 = vpack.c.b16 %v569, %v567
    %v732 = vpack.c.b16 %v570, %v568
    %v733 = vpack.c.b16 %v573, %v571
    %v734 = vpack.c.b16 %v574, %v572
    %v735 = vpack.c.b16 %v577, %v575
    %v736 = vpack.c.b16 %v578, %v576
    %v737 = vpack.c.b16 %v581, %v579
    %v738 = vpack.c.b16 %v582, %v580
    %v739 = vpack.c.b16 %v585, %v583
    %v740 = vpack.c.b16 %v586, %v584
    %v741 = vpack.c.b16 %v589, %v587
    %v742 = vpack.c.b16 %v590, %v588
    %v743 = vpack.c.b16 %v593, %v591
    %v744 = vpack.c.b16 %v594, %v592
    %v745 = vpack.c.b16 %v597, %v595
    %v746 = vpack.c.b16 %v598, %v596
    %v747 = vpack.c.b16 %v601, %v599
    %v748 = vpack.c.b16 %v602, %v600
    %v749 = vpack.c.b16 %v605, %v603
    %v750 = vpack.c.b16 %v606, %v604
    %v751 = vpack.c.b16 %v609, %v607
    %v752 = vpack.c.b16 %v610, %v608
    %v753 = vpack.c.b16 %v613, %v611
    %v754 = vpack.c.b16 %v614, %v612
    %v755 = vpack.c.b16 %v617, %v615
    %v756 = vpack.c.b16 %v618, %v616
    %v757 = vpack.c.b16 %v621, %v619
    %v758 = vpack.c.b16 %v622, %v620
    %v759 = vpack.c.b16 %v625, %v623
    %v760 = vpack.c.b16 %v626, %v624
    %v761 = vpack.c.b16 %v629, %v627
    %v762 = vpack.c.b16 %v630, %v628
    %v763 = vpack.c.b16 %v633, %v631
    %v764 = vpack.c.b16 %v634, %v632
    %v765 = vpack.c.b16 %v637, %v635
    %v766 = vpack.c.b16 %v638, %v636
    %895 = vmatprep.subr.bf16.mxu0 %v640
    %896 = vmatpush1.bf16.msra.mxu0 %v639
    %897 = vmatprep.subr.bf16.mxu0 %v642
    %898 = vmatpush1.bf16.msra.mxu0 %v641
    %899 = vmatprep.subr.bf16.mxu0 %v644
    %900 = vmatpush1.bf16.msra.mxu0 %v643
    %901 = vmatprep.subr.bf16.mxu0 %v646
    %902 = vmatpush1.bf16.msra.mxu0 %v645
    %903 = vmatprep.subr.bf16.mxu0 %v648
    %904 = vmatpush1.bf16.msra.mxu0 %v647
    %905 = vmatprep.subr.bf16.mxu0 %v650
    %906 = vmatpush1.bf16.msra.mxu0 %v649
    %907 = vmatprep.subr.bf16.mxu0 %v652
    %908 = vmatpush1.bf16.msra.mxu0 %v651
    %909 = vmatprep.subr.bf16.mxu0 %v654
    %910 = vmatpush1.bf16.msra.mxu0 %v653
    %911 = vmatprep.subr.bf16.mxu0 %v656
    %912 = vmatpush1.bf16.msra.mxu0 %v655
    %913 = vmatprep.subr.bf16.mxu0 %v658
    %914 = vmatpush1.bf16.msra.mxu0 %v657
    %915 = vmatprep.subr.bf16.mxu0 %v660
    %916 = vmatpush1.bf16.msra.mxu0 %v659
    %917 = vmatprep.subr.bf16.mxu0 %v662
    %918 = vmatpush1.bf16.msra.mxu0 %v661
    %919 = vmatprep.subr.bf16.mxu0 %v664
    %920 = vmatpush1.bf16.msra.mxu0 %v663
    %921 = vmatprep.subr.bf16.mxu0 %v666
    %922 = vmatpush1.bf16.msra.mxu0 %v665
    %923 = vmatprep.subr.bf16.mxu0 %v668
    %924 = vmatpush1.bf16.msra.mxu0 %v667
    %925 = vmatprep.subr.bf16.mxu0 %v670
    %926 = vmatpush1.bf16.msra.mxu0 %v669
    %927 = vmatprep.mubr.bf16.mxu0 %v235
    %928 = vmatmul.mubr.bf16.gmra.mrb[0].mxu0 %v221
    %v929 = vpop.f32.mrb[0].mxu0
    %v930 = vadd.f32 %v190, %v929
    %v931 = vpop.f32.mrb[0].mxu0
    %v932 = vadd.f32 %v194, %v931
    %v933 = vpop.f32.mrb[0].mxu0
    %v934 = vpop.f32.mrb[0].mxu0
    %935 = vdwg.mxu0
    %936 = vmatprep.subr.bf16.mxu0 %v672
    %937 = vmatpush1.bf16.msra.mxu0 %v671
    %938 = vmatprep.subr.bf16.mxu0 %v674
    %939 = vmatpush1.bf16.msra.mxu0 %v673
    %940 = vmatprep.subr.bf16.mxu0 %v676
    %941 = vmatpush1.bf16.msra.mxu0 %v675
    %942 = vmatprep.subr.bf16.mxu0 %v678
    %943 = vmatpush1.bf16.msra.mxu0 %v677
    %944 = vmatprep.subr.bf16.mxu0 %v680
    %945 = vmatpush1.bf16.msra.mxu0 %v679
    %946 = vmatprep.subr.bf16.mxu0 %v682
    %947 = vmatpush1.bf16.msra.mxu0 %v681
    %948 = vmatprep.subr.bf16.mxu0 %v684
    %949 = vmatpush1.bf16.msra.mxu0 %v683
    %950 = vmatprep.subr.bf16.mxu0 %v686
    %951 = vmatpush1.bf16.msra.mxu0 %v685
    %952 = vmatprep.subr.bf16.mxu0 %v688
    %953 = vmatpush1.bf16.msra.mxu0 %v687
    %954 = vmatprep.subr.bf16.mxu0 %v690
    %955 = vmatpush1.bf16.msra.mxu0 %v689
    %956 = vmatprep.subr.bf16.mxu0 %v692
    %957 = vmatpush1.bf16.msra.mxu0 %v691
    %958 = vmatprep.subr.bf16.mxu0 %v694
    %959 = vmatpush1.bf16.msra.mxu0 %v693
    %960 = vmatprep.subr.bf16.mxu0 %v696
    %961 = vmatpush1.bf16.msra.mxu0 %v695
    %962 = vmatprep.subr.bf16.mxu0 %v698
    %963 = vmatpush1.bf16.msra.mxu0 %v697
    %964 = vmatprep.subr.bf16.mxu0 %v700
    %965 = vmatpush1.bf16.msra.mxu0 %v699
    %966 = vmatprep.subr.bf16.mxu0 %v702
    %967 = vmatpush1.bf16.msra.mxu0 %v701
    %968 = vmatprep.mubr.bf16.mxu0 %v245
    %969 = vmatmul.mubr.bf16.gmra.mrb[0].mxu0 %v243
    %v970 = vpop.f32.mrb[0].mxu0
    %v971 = vadd.f32 %v930, %v970
    %v972 = vpop.f32.mrb[0].mxu0
    %v973 = vadd.f32 %v932, %v972
    %v974 = vpop.f32.mrb[0].mxu0
    %v975 = vpop.f32.mrb[0].mxu0
    %976 = vdwg.mxu0
    %977 = vmatprep.subr.bf16.mxu0 %v704
    %978 = vmatpush1.bf16.msra.mxu0 %v703
    %979 = vmatprep.subr.bf16.mxu0 %v706
    %980 = vmatpush1.bf16.msra.mxu0 %v705
    %981 = vmatprep.subr.bf16.mxu0 %v708
    %982 = vmatpush1.bf16.msra.mxu0 %v707
    %983 = vmatprep.subr.bf16.mxu0 %v710
    %984 = vmatpush1.bf16.msra.mxu0 %v709
    %985 = vmatprep.subr.bf16.mxu0 %v712
    %986 = vmatpush1.bf16.msra.mxu0 %v711
    %987 = vmatprep.subr.bf16.mxu0 %v714
    %988 = vmatpush1.bf16.msra.mxu0 %v713
    %989 = vmatprep.subr.bf16.mxu0 %v716
    %990 = vmatpush1.bf16.msra.mxu0 %v715
    %991 = vmatprep.subr.bf16.mxu0 %v718
    %992 = vmatpush1.bf16.msra.mxu0 %v717
    %993 = vmatprep.subr.bf16.mxu0 %v720
    %994 = vmatpush1.bf16.msra.mxu0 %v719
    %995 = vmatprep.subr.bf16.mxu0 %v722
    %996 = vmatpush1.bf16.msra.mxu0 %v721
    %997 = vmatprep.subr.bf16.mxu0 %v724
    %998 = vmatpush1.bf16.msra.mxu0 %v723
    %999 = vmatprep.subr.bf16.mxu0 %v726
    %1000 = vmatpush1.bf16.msra.mxu0 %v725
    %1001 = vmatprep.subr.bf16.mxu0 %v728
    %1002 = vmatpush1.bf16.msra.mxu0 %v727
    %1003 = vmatprep.subr.bf16.mxu0 %v730
    %1004 = vmatpush1.bf16.msra.mxu0 %v729
    %1005 = vmatprep.subr.bf16.mxu0 %v732
    %1006 = vmatpush1.bf16.msra.mxu0 %v731
    %1007 = vmatprep.subr.bf16.mxu0 %v734
    %1008 = vmatpush1.bf16.msra.mxu0 %v733
    %1009 = vmatprep.mubr.bf16.mxu0 %v242
    %1010 = vmatmul.mubr.bf16.gmra.mrb[0].mxu0 %v228
    %v1011 = vpop.f32.mrb[0].mxu0
    %v1012 = vadd.f32 %v971, %v1011
    %v1013 = vpop.f32.mrb[0].mxu0
    %v1014 = vadd.f32 %v973, %v1013
    %v1015 = vpop.f32.mrb[0].mxu0
    %v1016 = vpop.f32.mrb[0].mxu0
    %1017 = vdwg.mxu0
    %1018 = vmatprep.subr.bf16.mxu0 %v736
    %1019 = vmatpush1.bf16.msra.mxu0 %v735
    %1020 = vmatprep.subr.bf16.mxu0 %v738
    %1021 = vmatpush1.bf16.msra.mxu0 %v737
    %1022 = vmatprep.subr.bf16.mxu0 %v740
    %1023 = vmatpush1.bf16.msra.mxu0 %v739
    %1024 = vmatprep.subr.bf16.mxu0 %v742
    %1025 = vmatpush1.bf16.msra.mxu0 %v741
    %1026 = vmatprep.subr.bf16.mxu0 %v744
    %1027 = vmatpush1.bf16.msra.mxu0 %v743
    %1028 = vmatprep.subr.bf16.mxu0 %v746
    %1029 = vmatpush1.bf16.msra.mxu0 %v745
    %1030 = vmatprep.subr.bf16.mxu0 %v748
    %1031 = vmatpush1.bf16.msra.mxu0 %v747
    %1032 = vmatprep.subr.bf16.mxu0 %v750
    %1033 = vmatpush1.bf16.msra.mxu0 %v749
    %1034 = vmatprep.subr.bf16.mxu0 %v752
    %1035 = vmatpush1.bf16.msra.mxu0 %v751
    %1036 = vmatprep.subr.bf16.mxu0 %v754
    %1037 = vmatpush1.bf16.msra.mxu0 %v753
    %1038 = vmatprep.subr.bf16.mxu0 %v756
    %1039 = vmatpush1.bf16.msra.mxu0 %v755
    %1040 = vmatprep.subr.bf16.mxu0 %v758
    %1041 = vmatpush1.bf16.msra.mxu0 %v757
    %1042 = vmatprep.subr.bf16.mxu0 %v760
    %1043 = vmatpush1.bf16.msra.mxu0 %v759
    %1044 = vmatprep.subr.bf16.mxu0 %v762
    %1045 = vmatpush1.bf16.msra.mxu0 %v761
    %1046 = vmatprep.subr.bf16.mxu0 %v764
    %1047 = vmatpush1.bf16.msra.mxu0 %v763
    %1048 = vmatprep.subr.bf16.mxu0 %v766
    %1049 = vmatpush1.bf16.msra.mxu0 %v765
    %1050 = vmatprep.mubr.bf16.mxu0 %v246
    %1051 = vmatmul.mubr.bf16.gmra.mrb[0].mxu0 %v244
    %v1052 = vpop.f32.mrb[0].mxu0
    %v1053 = vadd.f32 %v1012, %v1052
    %v1054 = vpop.f32.mrb[0].mxu0
    %v1055 = vadd.f32 %v1014, %v1054
    %v1056 = vpop.f32.mrb[0].mxu0
    %v1057 = vpop.f32.mrb[0].mxu0
    %1058 = vdwg.mxu0
    %v1059 = vmax.f32 %v1053, 0.0
    %v1060 = vmax.f32 %v1055, 0.0
    %v1061 = vpack.c.bf16 %v1059, %v1059
    %v1062 = vpack.c.bf16 %v1060, %v1060
    %v1063 = vld [vmem:[#allocation5] sm:$0xff]
    %v1064 = vld [vmem:[#allocation5 + $0x8] sm:$0xff]
    %v1065 = vld [vmem:[#allocation5 + $0x10] sm:$0xff]
    %v1066 = vld [vmem:[#allocation5 + $0x18] sm:$0xff]
    %v1067 = vld [vmem:[#allocation5 + $0x20] sm:$0xff]
    %v1068 = vld [vmem:[#allocation5 + $0x28] sm:$0xff]
    %v1069 = vld [vmem:[#allocation5 + $0x30] sm:$0xff]
    %v1070 = vld [vmem:[#allocation5 + $0x38] sm:$0xff]
    %v1071 = vld [vmem:[#allocation5 + $0x40] sm:$0xff]
    %v1072 = vld [vmem:[#allocation5 + $0x48] sm:$0xff]
    %v1073 = vld [vmem:[#allocation5 + $0x50] sm:$0xff]
    %v1074 = vld [vmem:[#allocation5 + $0x58] sm:$0xff]
    %v1075 = vld [vmem:[#allocation5 + $0x60] sm:$0xff]
    %v1076 = vld [vmem:[#allocation5 + $0x68] sm:$0xff]
    %v1077 = vld [vmem:[#allocation5 + $0x70] sm:$0xff]
    %v1078 = vld [vmem:[#allocation5 + $0x78] sm:$0xff]
    %v1079 = vld [vmem:[#allocation5 + $0x80] sm:$0xff]
    %v1080 = vld [vmem:[#allocation5 + $0x88] sm:$0xff]
    %v1081 = vld [vmem:[#allocation5 + $0x90] sm:$0xff]
    %v1082 = vld [vmem:[#allocation5 + $0x98] sm:$0xff]
    %v1083 = vld [vmem:[#allocation5 + $0xa0] sm:$0xff]
    %v1084 = vld [vmem:[#allocation5 + $0xa8] sm:$0xff]
    %v1085 = vld [vmem:[#allocation5 + $0xb0] sm:$0xff]
    %v1086 = vld [vmem:[#allocation5 + $0xb8] sm:$0xff]
    %v1087 = vld [vmem:[#allocation5 + $0xc0] sm:$0xff]
    %v1088 = vld [vmem:[#allocation5 + $0xc8] sm:$0xff]
    %v1089 = vld [vmem:[#allocation5 + $0xd0] sm:$0xff]
    %v1090 = vld [vmem:[#allocation5 + $0xd8] sm:$0xff]
    %v1091 = vld [vmem:[#allocation5 + $0xe0] sm:$0xff]
    %v1092 = vld [vmem:[#allocation5 + $0xe8] sm:$0xff]
    %v1093 = vld [vmem:[#allocation5 + $0xf0] sm:$0xff]
    %v1094 = vld [vmem:[#allocation5 + $0xf8] sm:$0xff]
    %v1095 = vld [vmem:[#allocation5 + $0x100] sm:$0xff]
    %v1096 = vld [vmem:[#allocation5 + $0x108] sm:$0xff]
    %v1097 = vld [vmem:[#allocation5 + $0x110] sm:$0xff]
    %v1098 = vld [vmem:[#allocation5 + $0x118] sm:$0xff]
    %v1099 = vld [vmem:[#allocation5 + $0x120] sm:$0xff]
    %v1100 = vld [vmem:[#allocation5 + $0x128] sm:$0xff]
    %v1101 = vld [vmem:[#allocation5 + $0x130] sm:$0xff]
    %v1102 = vld [vmem:[#allocation5 + $0x138] sm:$0xff]
    %v1103 = vld [vmem:[#allocation5 + $0x140] sm:$0xff]
    %v1104 = vld [vmem:[#allocation5 + $0x148] sm:$0xff]
    %v1105 = vld [vmem:[#allocation5 + $0x150] sm:$0xff]
    %v1106 = vld [vmem:[#allocation5 + $0x158] sm:$0xff]
    %v1107 = vld [vmem:[#allocation5 + $0x160] sm:$0xff]
    %v1108 = vld [vmem:[#allocation5 + $0x168] sm:$0xff]
    %v1109 = vld [vmem:[#allocation5 + $0x170] sm:$0xff]
    %v1110 = vld [vmem:[#allocation5 + $0x178] sm:$0xff]
    %v1111 = vld [vmem:[#allocation5 + $0x180] sm:$0xff]
    %v1112 = vld [vmem:[#allocation5 + $0x188] sm:$0xff]
    %v1113 = vld [vmem:[#allocation5 + $0x190] sm:$0xff]
    %v1114 = vld [vmem:[#allocation5 + $0x198] sm:$0xff]
    %v1115 = vld [vmem:[#allocation5 + $0x1a0] sm:$0xff]
    %v1116 = vld [vmem:[#allocation5 + $0x1a8] sm:$0xff]
    %v1117 = vld [vmem:[#allocation5 + $0x1b0] sm:$0xff]
    %v1118 = vld [vmem:[#allocation5 + $0x1b8] sm:$0xff]
    %v1119 = vld [vmem:[#allocation5 + $0x1c0] sm:$0xff]
    %v1120 = vld [vmem:[#allocation5 + $0x1c8] sm:$0xff]
    %v1121 = vld [vmem:[#allocation5 + $0x1d0] sm:$0xff]
    %v1122 = vld [vmem:[#allocation5 + $0x1d8] sm:$0xff]
    %v1123 = vld [vmem:[#allocation5 + $0x1e0] sm:$0xff]
    %v1124 = vld [vmem:[#allocation5 + $0x1e8] sm:$0xff]
    %v1125 = vld [vmem:[#allocation5 + $0x1f0] sm:$0xff]
    %v1126 = vld [vmem:[#allocation5 + $0x1f8] sm:$0xff]
    %v1127 = vld [vmem:[#allocation5 + $0x200] sm:$0xff]
    %v1128 = vld [vmem:[#allocation5 + $0x208] sm:$0xff]
    %v1129 = vld [vmem:[#allocation5 + $0x210] sm:$0xff]
    %v1130 = vld [vmem:[#allocation5 + $0x218] sm:$0xff]
    %v1131 = vld [vmem:[#allocation5 + $0x220] sm:$0xff]
    %v1132 = vld [vmem:[#allocation5 + $0x228] sm:$0xff]
    %v1133 = vld [vmem:[#allocation5 + $0x230] sm:$0xff]
    %v1134 = vld [vmem:[#allocation5 + $0x238] sm:$0xff]
    %v1135 = vld [vmem:[#allocation5 + $0x240] sm:$0xff]
    %v1136 = vld [vmem:[#allocation5 + $0x248] sm:$0xff]
    %v1137 = vld [vmem:[#allocation5 + $0x250] sm:$0xff]
    %v1138 = vld [vmem:[#allocation5 + $0x258] sm:$0xff]
    %v1139 = vld [vmem:[#allocation5 + $0x260] sm:$0xff]
    %v1140 = vld [vmem:[#allocation5 + $0x268] sm:$0xff]
    %v1141 = vld [vmem:[#allocation5 + $0x270] sm:$0xff]
    %v1142 = vld [vmem:[#allocation5 + $0x278] sm:$0xff]
    %v1143 = vld [vmem:[#allocation5 + $0x280] sm:$0xff]
    %v1144 = vld [vmem:[#allocation5 + $0x288] sm:$0xff]
    %v1145 = vld [vmem:[#allocation5 + $0x290] sm:$0xff]
    %v1146 = vld [vmem:[#allocation5 + $0x298] sm:$0xff]
    %v1147 = vld [vmem:[#allocation5 + $0x2a0] sm:$0xff]
    %v1148 = vld [vmem:[#allocation5 + $0x2a8] sm:$0xff]
    %v1149 = vld [vmem:[#allocation5 + $0x2b0] sm:$0xff]
    %v1150 = vld [vmem:[#allocation5 + $0x2b8] sm:$0xff]
    %v1151 = vld [vmem:[#allocation5 + $0x2c0] sm:$0xff]
    %v1152 = vld [vmem:[#allocation5 + $0x2c8] sm:$0xff]
    %v1153 = vld [vmem:[#allocation5 + $0x2d0] sm:$0xff]
    %v1154 = vld [vmem:[#allocation5 + $0x2d8] sm:$0xff]
    %v1155 = vld [vmem:[#allocation5 + $0x2e0] sm:$0xff]
    %v1156 = vld [vmem:[#allocation5 + $0x2e8] sm:$0xff]
    %v1157 = vld [vmem:[#allocation5 + $0x2f0] sm:$0xff]
    %v1158 = vld [vmem:[#allocation5 + $0x2f8] sm:$0xff]
    %v1159 = vld [vmem:[#allocation5 + $0x300] sm:$0xff]
    %v1160 = vld [vmem:[#allocation5 + $0x308] sm:$0xff]
    %v1161 = vld [vmem:[#allocation5 + $0x310] sm:$0xff]
    %v1162 = vld [vmem:[#allocation5 + $0x318] sm:$0xff]
    %v1163 = vld [vmem:[#allocation5 + $0x320] sm:$0xff]
    %v1164 = vld [vmem:[#allocation5 + $0x328] sm:$0xff]
    %v1165 = vld [vmem:[#allocation5 + $0x330] sm:$0xff]
    %v1166 = vld [vmem:[#allocation5 + $0x338] sm:$0xff]
    %v1167 = vld [vmem:[#allocation5 + $0x340] sm:$0xff]
    %v1168 = vld [vmem:[#allocation5 + $0x348] sm:$0xff]
    %v1169 = vld [vmem:[#allocation5 + $0x350] sm:$0xff]
    %v1170 = vld [vmem:[#allocation5 + $0x358] sm:$0xff]
    %v1171 = vld [vmem:[#allocation5 + $0x360] sm:$0xff]
    %v1172 = vld [vmem:[#allocation5 + $0x368] sm:$0xff]
    %v1173 = vld [vmem:[#allocation5 + $0x370] sm:$0xff]
    %v1174 = vld [vmem:[#allocation5 + $0x378] sm:$0xff]
    %v1175 = vld [vmem:[#allocation5 + $0x380] sm:$0xff]
    %v1176 = vld [vmem:[#allocation5 + $0x388] sm:$0xff]
    %v1177 = vld [vmem:[#allocation5 + $0x390] sm:$0xff]
    %v1178 = vld [vmem:[#allocation5 + $0x398] sm:$0xff]
    %v1179 = vld [vmem:[#allocation5 + $0x3a0] sm:$0xff]
    %v1180 = vld [vmem:[#allocation5 + $0x3a8] sm:$0xff]
    %v1181 = vld [vmem:[#allocation5 + $0x3b0] sm:$0xff]
    %v1182 = vld [vmem:[#allocation5 + $0x3b8] sm:$0xff]
    %v1183 = vld [vmem:[#allocation5 + $0x3c0] sm:$0xff]
    %v1184 = vld [vmem:[#allocation5 + $0x3c8] sm:$0xff]
    %v1185 = vld [vmem:[#allocation5 + $0x3d0] sm:$0xff]
    %v1186 = vld [vmem:[#allocation5 + $0x3d8] sm:$0xff]
    %v1187 = vld [vmem:[#allocation5 + $0x3e0] sm:$0xff]
    %v1188 = vld [vmem:[#allocation5 + $0x3e8] sm:$0xff]
    %v1189 = vld [vmem:[#allocation5 + $0x3f0] sm:$0xff]
    %v1190 = vld [vmem:[#allocation5 + $0x3f8] sm:$0xff]
    %v1191 = vld [vmem:[#allocation5 + $0x400] sm:$0xff]
    %v1192 = vld [vmem:[#allocation5 + $0x408] sm:$0xff]
    %v1193 = vld [vmem:[#allocation5 + $0x410] sm:$0xff]
    %v1194 = vld [vmem:[#allocation5 + $0x418] sm:$0xff]
    %v1195 = vld [vmem:[#allocation5 + $0x420] sm:$0xff]
    %v1196 = vld [vmem:[#allocation5 + $0x428] sm:$0xff]
    %v1197 = vld [vmem:[#allocation5 + $0x430] sm:$0xff]
    %v1198 = vld [vmem:[#allocation5 + $0x438] sm:$0xff]
    %v1199 = vld [vmem:[#allocation5 + $0x440] sm:$0xff]
    %v1200 = vld [vmem:[#allocation5 + $0x448] sm:$0xff]
    %v1201 = vld [vmem:[#allocation5 + $0x450] sm:$0xff]
    %v1202 = vld [vmem:[#allocation5 + $0x458] sm:$0xff]
    %v1203 = vld [vmem:[#allocation5 + $0x460] sm:$0xff]
    %v1204 = vld [vmem:[#allocation5 + $0x468] sm:$0xff]
    %v1205 = vld [vmem:[#allocation5 + $0x470] sm:$0xff]
    %v1206 = vld [vmem:[#allocation5 + $0x478] sm:$0xff]
    %v1207 = vld [vmem:[#allocation5 + $0x480] sm:$0xff]
    %v1208 = vld [vmem:[#allocation5 + $0x488] sm:$0xff]
    %v1209 = vld [vmem:[#allocation5 + $0x490] sm:$0xff]
    %v1210 = vld [vmem:[#allocation5 + $0x498] sm:$0xff]
    %v1211 = vld [vmem:[#allocation5 + $0x4a0] sm:$0xff]
    %v1212 = vld [vmem:[#allocation5 + $0x4a8] sm:$0xff]
    %v1213 = vld [vmem:[#allocation5 + $0x4b0] sm:$0xff]
    %v1214 = vld [vmem:[#allocation5 + $0x4b8] sm:$0xff]
    %v1215 = vld [vmem:[#allocation5 + $0x4c0] sm:$0xff]
    %v1216 = vld [vmem:[#allocation5 + $0x4c8] sm:$0xff]
    %v1217 = vld [vmem:[#allocation5 + $0x4d0] sm:$0xff]
    %v1218 = vld [vmem:[#allocation5 + $0x4d8] sm:$0xff]
    %v1219 = vld [vmem:[#allocation5 + $0x4e0] sm:$0xff]
    %v1220 = vld [vmem:[#allocation5 + $0x4e8] sm:$0xff]
    %v1221 = vld [vmem:[#allocation5 + $0x4f0] sm:$0xff]
    %v1222 = vld [vmem:[#allocation5 + $0x4f8] sm:$0xff]
    %v1223 = vld [vmem:[%s4] sm:$0xff]
    %v1224 = vld [vmem:[%s4 + $0x8] sm:$0x3]
    %v1227 = vlaneseq
    %v1228 = vshrl.u32 %v1227, 7
    %v1229 = vsub.s32 0, %v1228
    %v1230 = vrot.slane %v1223, %v1229
    %v1231 = vlaneseq
    %v1232 = vshrl.u32 %v1231, 7
    %v1233 = vsub.s32 1, %v1232
    %v1234 = vrot.slane %v1223, %v1233
    %v1235 = vlaneseq
    %v1236 = vshrl.u32 %v1235, 7
    %v1237 = vsub.s32 2, %v1236
    %v1238 = vrot.slane %v1223, %v1237
    %v1239 = vlaneseq
    %v1240 = vshrl.u32 %v1239, 7
    %v1241 = vsub.s32 3, %v1240
    %v1242 = vrot.slane %v1223, %v1241
    %v1243 = vlaneseq
    %v1244 = vshrl.u32 %v1243, 7
    %v1245 = vsub.s32 4, %v1244
    %v1246 = vrot.slane %v1223, %v1245
    %v1247 = vlaneseq
    %v1248 = vshrl.u32 %v1247, 7
    %v1249 = vsub.s32 5, %v1248
    %v1250 = vrot.slane %v1223, %v1249
    %v1251 = vlaneseq
    %v1252 = vshrl.u32 %v1251, 7
    %v1253 = vsub.s32 6, %v1252
    %v1254 = vrot.slane %v1223, %v1253
    %v1255 = vlaneseq
    %v1256 = vshrl.u32 %v1255, 7
    %v1257 = vsub.s32 7, %v1256
    %v1258 = vrot.slane %v1223, %v1257
    %v1259 = vlaneseq
    %v1260 = vshrl.u32 %v1259, 7
    %v1261 = vsub.s32 0, %v1260
    %v1262 = vrot.slane %v1224, %v1261
    %v1263 = vlaneseq
    %v1264 = vshrl.u32 %v1263, 7
    %v1265 = vsub.s32 1, %v1264
    %v1266 = vrot.slane %v1224, %v1265
    %v1437 = vunpack.c.l.b16 %v1063
    %v1438 = vunpack.c.h.b16 %v1063
    %v1439 = vunpack.c.l.b16 %v1064
    %v1440 = vunpack.c.h.b16 %v1064
    %v1441 = vunpack.c.l.b16 %v1065
    %v1442 = vunpack.c.h.b16 %v1065
    %v1443 = vunpack.c.l.b16 %v1066
    %v1444 = vunpack.c.h.b16 %v1066
    %v1445 = vunpack.c.l.b16 %v1067
    %v1446 = vunpack.c.h.b16 %v1067
    %v1447 = vunpack.c.l.b16 %v1068
    %v1448 = vunpack.c.h.b16 %v1068
    %v1449 = vunpack.c.l.b16 %v1069
    %v1450 = vunpack.c.h.b16 %v1069
    %v1451 = vunpack.c.l.b16 %v1070
    %v1452 = vunpack.c.h.b16 %v1070
    %v1453 = vunpack.c.l.b16 %v1071
    %v1454 = vunpack.c.h.b16 %v1071
    %v1455 = vunpack.c.l.b16 %v1072
    %v1456 = vunpack.c.h.b16 %v1072
    %v1457 = vunpack.c.l.b16 %v1073
    %v1458 = vunpack.c.h.b16 %v1073
    %v1459 = vunpack.c.l.b16 %v1074
    %v1460 = vunpack.c.h.b16 %v1074
    %v1461 = vunpack.c.l.b16 %v1075
    %v1462 = vunpack.c.h.b16 %v1075
    %v1463 = vunpack.c.l.b16 %v1076
    %v1464 = vunpack.c.h.b16 %v1076
    %v1465 = vunpack.c.l.b16 %v1077
    %v1466 = vunpack.c.h.b16 %v1077
    %v1467 = vunpack.c.l.b16 %v1078
    %v1468 = vunpack.c.h.b16 %v1078
    %v1469 = vunpack.c.l.b16 %v1079
    %v1470 = vunpack.c.h.b16 %v1079
    %v1471 = vunpack.c.l.b16 %v1080
    %v1472 = vunpack.c.h.b16 %v1080
    %v1473 = vunpack.c.l.b16 %v1081
    %v1474 = vunpack.c.h.b16 %v1081
    %v1475 = vunpack.c.l.b16 %v1082
    %v1476 = vunpack.c.h.b16 %v1082
    %v1477 = vunpack.c.l.b16 %v1083
    %v1478 = vunpack.c.h.b16 %v1083
    %v1479 = vunpack.c.l.b16 %v1084
    %v1480 = vunpack.c.h.b16 %v1084
    %v1481 = vunpack.c.l.b16 %v1085
    %v1482 = vunpack.c.h.b16 %v1085
    %v1483 = vunpack.c.l.b16 %v1086
    %v1484 = vunpack.c.h.b16 %v1086
    %v1485 = vunpack.c.l.b16 %v1087
    %v1486 = vunpack.c.h.b16 %v1087
    %v1487 = vunpack.c.l.b16 %v1088
    %v1488 = vunpack.c.h.b16 %v1088
    %v1489 = vunpack.c.l.b16 %v1089
    %v1490 = vunpack.c.h.b16 %v1089
    %v1491 = vunpack.c.l.b16 %v1090
    %v1492 = vunpack.c.h.b16 %v1090
    %v1493 = vunpack.c.l.b16 %v1091
    %v1494 = vunpack.c.h.b16 %v1091
    %v1495 = vunpack.c.l.b16 %v1092
    %v1496 = vunpack.c.h.b16 %v1092
    %v1497 = vunpack.c.l.b16 %v1093
    %v1498 = vunpack.c.h.b16 %v1093
    %v1499 = vunpack.c.l.b16 %v1094
    %v1500 = vunpack.c.h.b16 %v1094
    %v1501 = vunpack.c.l.b16 %v1095
    %v1502 = vunpack.c.h.b16 %v1095
    %v1503 = vunpack.c.l.b16 %v1096
    %v1504 = vunpack.c.h.b16 %v1096
    %v1505 = vunpack.c.l.b16 %v1097
    %v1506 = vunpack.c.h.b16 %v1097
    %v1507 = vunpack.c.l.b16 %v1098
    %v1508 = vunpack.c.h.b16 %v1098
    %v1509 = vunpack.c.l.b16 %v1099
    %v1510 = vunpack.c.h.b16 %v1099
    %v1511 = vunpack.c.l.b16 %v1100
    %v1512 = vunpack.c.h.b16 %v1100
    %v1513 = vunpack.c.l.b16 %v1101
    %v1514 = vunpack.c.h.b16 %v1101
    %v1515 = vunpack.c.l.b16 %v1102
    %v1516 = vunpack.c.h.b16 %v1102
    %v1517 = vunpack.c.l.b16 %v1103
    %v1518 = vunpack.c.h.b16 %v1103
    %v1519 = vunpack.c.l.b16 %v1104
    %v1520 = vunpack.c.h.b16 %v1104
    %v1521 = vunpack.c.l.b16 %v1105
    %v1522 = vunpack.c.h.b16 %v1105
    %v1523 = vunpack.c.l.b16 %v1106
    %v1524 = vunpack.c.h.b16 %v1106
    %v1525 = vunpack.c.l.b16 %v1107
    %v1526 = vunpack.c.h.b16 %v1107
    %v1527 = vunpack.c.l.b16 %v1108
    %v1528 = vunpack.c.h.b16 %v1108
    %v1529 = vunpack.c.l.b16 %v1109
    %v1530 = vunpack.c.h.b16 %v1109
    %v1531 = vunpack.c.l.b16 %v1110
    %v1532 = vunpack.c.h.b16 %v1110
    %v1533 = vunpack.c.l.b16 %v1111
    %v1534 = vunpack.c.h.b16 %v1111
    %v1535 = vunpack.c.l.b16 %v1112
    %v1536 = vunpack.c.h.b16 %v1112
    %v1537 = vunpack.c.l.b16 %v1113
    %v1538 = vunpack.c.h.b16 %v1113
    %v1539 = vunpack.c.l.b16 %v1114
    %v1540 = vunpack.c.h.b16 %v1114
    %v1541 = vunpack.c.l.b16 %v1115
    %v1542 = vunpack.c.h.b16 %v1115
    %v1543 = vunpack.c.l.b16 %v1116
    %v1544 = vunpack.c.h.b16 %v1116
    %v1545 = vunpack.c.l.b16 %v1117
    %v1546 = vunpack.c.h.b16 %v1117
    %v1547 = vunpack.c.l.b16 %v1118
    %v1548 = vunpack.c.h.b16 %v1118
    %v1549 = vunpack.c.l.b16 %v1119
    %v1550 = vunpack.c.h.b16 %v1119
    %v1551 = vunpack.c.l.b16 %v1120
    %v1552 = vunpack.c.h.b16 %v1120
    %v1553 = vunpack.c.l.b16 %v1121
    %v1554 = vunpack.c.h.b16 %v1121
    %v1555 = vunpack.c.l.b16 %v1122
    %v1556 = vunpack.c.h.b16 %v1122
    %v1557 = vunpack.c.l.b16 %v1123
    %v1558 = vunpack.c.h.b16 %v1123
    %v1559 = vunpack.c.l.b16 %v1124
    %v1560 = vunpack.c.h.b16 %v1124
    %v1561 = vunpack.c.l.b16 %v1125
    %v1562 = vunpack.c.h.b16 %v1125
    %v1563 = vunpack.c.l.b16 %v1126
    %v1564 = vunpack.c.h.b16 %v1126
    %v1565 = vunpack.c.l.b16 %v1127
    %v1566 = vunpack.c.h.b16 %v1127
    %v1567 = vunpack.c.l.b16 %v1128
    %v1568 = vunpack.c.h.b16 %v1128
    %v1569 = vunpack.c.l.b16 %v1129
    %v1570 = vunpack.c.h.b16 %v1129
    %v1571 = vunpack.c.l.b16 %v1130
    %v1572 = vunpack.c.h.b16 %v1130
    %v1573 = vunpack.c.l.b16 %v1131
    %v1574 = vunpack.c.h.b16 %v1131
    %v1575 = vunpack.c.l.b16 %v1132
    %v1576 = vunpack.c.h.b16 %v1132
    %v1577 = vunpack.c.l.b16 %v1133
    %v1578 = vunpack.c.h.b16 %v1133
    %v1579 = vunpack.c.l.b16 %v1134
    %v1580 = vunpack.c.h.b16 %v1134
    %v1581 = vunpack.c.l.b16 %v1135
    %v1582 = vunpack.c.h.b16 %v1135
    %v1583 = vunpack.c.l.b16 %v1136
    %v1584 = vunpack.c.h.b16 %v1136
    %v1585 = vunpack.c.l.b16 %v1137
    %v1586 = vunpack.c.h.b16 %v1137
    %v1587 = vunpack.c.l.b16 %v1138
    %v1588 = vunpack.c.h.b16 %v1138
    %v1589 = vunpack.c.l.b16 %v1139
    %v1590 = vunpack.c.h.b16 %v1139
    %v1591 = vunpack.c.l.b16 %v1140
    %v1592 = vunpack.c.h.b16 %v1140
    %v1593 = vunpack.c.l.b16 %v1141
    %v1594 = vunpack.c.h.b16 %v1141
    %v1595 = vunpack.c.l.b16 %v1142
    %v1596 = vunpack.c.h.b16 %v1142
    %v1597 = vunpack.c.l.b16 %v1143
    %v1598 = vunpack.c.h.b16 %v1143
    %v1599 = vunpack.c.l.b16 %v1144
    %v1600 = vunpack.c.h.b16 %v1144
    %v1601 = vunpack.c.l.b16 %v1145
    %v1602 = vunpack.c.h.b16 %v1145
    %v1603 = vunpack.c.l.b16 %v1146
    %v1604 = vunpack.c.h.b16 %v1146
    %v1605 = vunpack.c.l.b16 %v1147
    %v1606 = vunpack.c.h.b16 %v1147
    %v1607 = vunpack.c.l.b16 %v1148
    %v1608 = vunpack.c.h.b16 %v1148
    %v1609 = vunpack.c.l.b16 %v1149
    %v1610 = vunpack.c.h.b16 %v1149
    %v1611 = vunpack.c.l.b16 %v1150
    %v1612 = vunpack.c.h.b16 %v1150
    %v1613 = vunpack.c.l.b16 %v1151
    %v1614 = vunpack.c.h.b16 %v1151
    %v1615 = vunpack.c.l.b16 %v1152
    %v1616 = vunpack.c.h.b16 %v1152
    %v1617 = vunpack.c.l.b16 %v1153
    %v1618 = vunpack.c.h.b16 %v1153
    %v1619 = vunpack.c.l.b16 %v1154
    %v1620 = vunpack.c.h.b16 %v1154
    %v1621 = vunpack.c.l.b16 %v1155
    %v1622 = vunpack.c.h.b16 %v1155
    %v1623 = vunpack.c.l.b16 %v1156
    %v1624 = vunpack.c.h.b16 %v1156
    %v1625 = vunpack.c.l.b16 %v1157
    %v1626 = vunpack.c.h.b16 %v1157
    %v1627 = vunpack.c.l.b16 %v1158
    %v1628 = vunpack.c.h.b16 %v1158
    %v1629 = vunpack.c.l.b16 %v1159
    %v1630 = vunpack.c.h.b16 %v1159
    %v1631 = vunpack.c.l.b16 %v1160
    %v1632 = vunpack.c.h.b16 %v1160
    %v1633 = vunpack.c.l.b16 %v1161
    %v1634 = vunpack.c.h.b16 %v1161
    %v1635 = vunpack.c.l.b16 %v1162
    %v1636 = vunpack.c.h.b16 %v1162
    %v1637 = vunpack.c.l.b16 %v1163
    %v1638 = vunpack.c.h.b16 %v1163
    %v1639 = vunpack.c.l.b16 %v1164
    %v1640 = vunpack.c.h.b16 %v1164
    %v1641 = vunpack.c.l.b16 %v1165
    %v1642 = vunpack.c.h.b16 %v1165
    %v1643 = vunpack.c.l.b16 %v1166
    %v1644 = vunpack.c.h.b16 %v1166
    %v1645 = vunpack.c.l.b16 %v1167
    %v1646 = vunpack.c.h.b16 %v1167
    %v1647 = vunpack.c.l.b16 %v1168
    %v1648 = vunpack.c.h.b16 %v1168
    %v1649 = vunpack.c.l.b16 %v1169
    %v1650 = vunpack.c.h.b16 %v1169
    %v1651 = vunpack.c.l.b16 %v1170
    %v1652 = vunpack.c.h.b16 %v1170
    %v1653 = vunpack.c.l.b16 %v1171
    %v1654 = vunpack.c.h.b16 %v1171
    %v1655 = vunpack.c.l.b16 %v1172
    %v1656 = vunpack.c.h.b16 %v1172
    %v1657 = vunpack.c.l.b16 %v1173
    %v1658 = vunpack.c.h.b16 %v1173
    %v1659 = vunpack.c.l.b16 %v1174
    %v1660 = vunpack.c.h.b16 %v1174
    %v1661 = vunpack.c.l.b16 %v1175
    %v1662 = vunpack.c.h.b16 %v1175
    %v1663 = vunpack.c.l.b16 %v1176
    %v1664 = vunpack.c.h.b16 %v1176
    %v1665 = vunpack.c.l.b16 %v1177
    %v1666 = vunpack.c.h.b16 %v1177
    %v1667 = vunpack.c.l.b16 %v1178
    %v1668 = vunpack.c.h.b16 %v1178
    %v1669 = vunpack.c.l.b16 %v1179
    %v1670 = vunpack.c.h.b16 %v1179
    %v1671 = vunpack.c.l.b16 %v1180
    %v1672 = vunpack.c.h.b16 %v1180
    %v1673 = vunpack.c.l.b16 %v1181
    %v1674 = vunpack.c.h.b16 %v1181
    %v1675 = vunpack.c.l.b16 %v1182
    %v1676 = vunpack.c.h.b16 %v1182
    %v1677 = vunpack.c.l.b16 %v1183
    %v1678 = vunpack.c.h.b16 %v1183
    %v1679 = vunpack.c.l.b16 %v1184
    %v1680 = vunpack.c.h.b16 %v1184
    %v1681 = vunpack.c.l.b16 %v1185
    %v1682 = vunpack.c.h.b16 %v1185
    %v1683 = vunpack.c.l.b16 %v1186
    %v1684 = vunpack.c.h.b16 %v1186
    %v1685 = vunpack.c.l.b16 %v1187
    %v1686 = vunpack.c.h.b16 %v1187
    %v1687 = vunpack.c.l.b16 %v1188
    %v1688 = vunpack.c.h.b16 %v1188
    %v1689 = vunpack.c.l.b16 %v1189
    %v1690 = vunpack.c.h.b16 %v1189
    %v1691 = vunpack.c.l.b16 %v1190
    %v1692 = vunpack.c.h.b16 %v1190
    %v1693 = vunpack.c.l.b16 %v1191
    %v1694 = vunpack.c.h.b16 %v1191
    %v1695 = vunpack.c.l.b16 %v1192
    %v1696 = vunpack.c.h.b16 %v1192
    %v1697 = vunpack.c.l.b16 %v1193
    %v1698 = vunpack.c.h.b16 %v1193
    %v1699 = vunpack.c.l.b16 %v1194
    %v1700 = vunpack.c.h.b16 %v1194
    %v1701 = vunpack.c.l.b16 %v1195
    %v1702 = vunpack.c.h.b16 %v1195
    %v1703 = vunpack.c.l.b16 %v1196
    %v1704 = vunpack.c.h.b16 %v1196
    %v1705 = vunpack.c.l.b16 %v1197
    %v1706 = vunpack.c.h.b16 %v1197
    %v1707 = vunpack.c.l.b16 %v1198
    %v1708 = vunpack.c.h.b16 %v1198
    %v1709 = vunpack.c.l.b16 %v1199
    %v1710 = vunpack.c.h.b16 %v1199
    %v1711 = vunpack.c.l.b16 %v1200
    %v1712 = vunpack.c.h.b16 %v1200
    %v1713 = vunpack.c.l.b16 %v1201
    %v1714 = vunpack.c.h.b16 %v1201
    %v1715 = vunpack.c.l.b16 %v1202
    %v1716 = vunpack.c.h.b16 %v1202
    %v1717 = vunpack.c.l.b16 %v1203
    %v1718 = vunpack.c.h.b16 %v1203
    %v1719 = vunpack.c.l.b16 %v1204
    %v1720 = vunpack.c.h.b16 %v1204
    %v1721 = vunpack.c.l.b16 %v1205
    %v1722 = vunpack.c.h.b16 %v1205
    %v1723 = vunpack.c.l.b16 %v1206
    %v1724 = vunpack.c.h.b16 %v1206
    %v1725 = vunpack.c.l.b16 %v1207
    %v1726 = vunpack.c.h.b16 %v1207
    %v1727 = vunpack.c.l.b16 %v1208
    %v1728 = vunpack.c.h.b16 %v1208
    %v1729 = vunpack.c.l.b16 %v1209
    %v1730 = vunpack.c.h.b16 %v1209
    %v1731 = vunpack.c.l.b16 %v1210
    %v1732 = vunpack.c.h.b16 %v1210
    %v1733 = vunpack.c.l.b16 %v1211
    %v1734 = vunpack.c.h.b16 %v1211
    %v1735 = vunpack.c.l.b16 %v1212
    %v1736 = vunpack.c.h.b16 %v1212
    %v1737 = vunpack.c.l.b16 %v1213
    %v1738 = vunpack.c.h.b16 %v1213
    %v1739 = vunpack.c.l.b16 %v1214
    %v1740 = vunpack.c.h.b16 %v1214
    %v1741 = vunpack.c.l.b16 %v1215
    %v1742 = vunpack.c.h.b16 %v1215
    %v1743 = vunpack.c.l.b16 %v1216
    %v1744 = vunpack.c.h.b16 %v1216
    %v1745 = vunpack.c.l.b16 %v1217
    %v1746 = vunpack.c.h.b16 %v1217
    %v1747 = vunpack.c.l.b16 %v1218
    %v1748 = vunpack.c.h.b16 %v1218
    %v1749 = vunpack.c.l.b16 %v1219
    %v1750 = vunpack.c.h.b16 %v1219
    %v1751 = vunpack.c.l.b16 %v1220
    %v1752 = vunpack.c.h.b16 %v1220
    %v1753 = vunpack.c.l.b16 %v1221
    %v1754 = vunpack.c.h.b16 %v1221
    %v1755 = vunpack.c.l.b16 %v1222
    %v1756 = vunpack.c.h.b16 %v1222
    %v1757 = vpack.c.b16 %v1447, %v1437
    %v1758 = vpack.c.b16 %v1448, %v1438
    %v1759 = vpack.c.b16 %v1449, %v1439
    %v1760 = vpack.c.b16 %v1450, %v1440
    %v1761 = vpack.c.b16 %v1451, %v1441
    %v1762 = vpack.c.b16 %v1452, %v1442
    %v1763 = vpack.c.b16 %v1453, %v1443
    %v1764 = vpack.c.b16 %v1454, %v1444
    %v1765 = vpack.c.b16 %v1455, %v1445
    %v1766 = vpack.c.b16 %v1456, %v1446
    %v1767 = vpack.c.b16 %v1467, %v1457
    %v1768 = vpack.c.b16 %v1468, %v1458
    %v1769 = vpack.c.b16 %v1469, %v1459
    %v1770 = vpack.c.b16 %v1470, %v1460
    %v1771 = vpack.c.b16 %v1471, %v1461
    %v1772 = vpack.c.b16 %v1472, %v1462
    %v1773 = vpack.c.b16 %v1473, %v1463
    %v1774 = vpack.c.b16 %v1474, %v1464
    %v1775 = vpack.c.b16 %v1475, %v1465
    %v1776 = vpack.c.b16 %v1476, %v1466
    %v1777 = vpack.c.b16 %v1487, %v1477
    %v1778 = vpack.c.b16 %v1488, %v1478
    %v1779 = vpack.c.b16 %v1489, %v1479
    %v1780 = vpack.c.b16 %v1490, %v1480
    %v1781 = vpack.c.b16 %v1491, %v1481
    %v1782 = vpack.c.b16 %v1492, %v1482
    %v1783 = vpack.c.b16 %v1493, %v1483
    %v1784 = vpack.c.b16 %v1494, %v1484
    %v1785 = vpack.c.b16 %v1495, %v1485
    %v1786 = vpack.c.b16 %v1496, %v1486
    %v1787 = vpack.c.b16 %v1507, %v1497
    %v1788 = vpack.c.b16 %v1508, %v1498
    %v1789 = vpack.c.b16 %v1509, %v1499
    %v1790 = vpack.c.b16 %v1510, %v1500
    %v1791 = vpack.c.b16 %v1511, %v1501
    %v1792 = vpack.c.b16 %v1512, %v1502
    %v1793 = vpack.c.b16 %v1513, %v1503
    %v1794 = vpack.c.b16 %v1514, %v1504
    %v1795 = vpack.c.b16 %v1515, %v1505
    %v1796 = vpack.c.b16 %v1516, %v1506
    %v1797 = vpack.c.b16 %v1527, %v1517
    %v1798 = vpack.c.b16 %v1528, %v1518
    %v1799 = vpack.c.b16 %v1529, %v1519
    %v1800 = vpack.c.b16 %v1530, %v1520
    %v1801 = vpack.c.b16 %v1531, %v1521
    %v1802 = vpack.c.b16 %v1532, %v1522
    %v1803 = vpack.c.b16 %v1533, %v1523
    %v1804 = vpack.c.b16 %v1534, %v1524
    %v1805 = vpack.c.b16 %v1535, %v1525
    %v1806 = vpack.c.b16 %v1536, %v1526
    %v1807 = vpack.c.b16 %v1547, %v1537
    %v1808 = vpack.c.b16 %v1548, %v1538
    %v1809 = vpack.c.b16 %v1549, %v1539
    %v1810 = vpack.c.b16 %v1550, %v1540
    %v1811 = vpack.c.b16 %v1551, %v1541
    %v1812 = vpack.c.b16 %v1552, %v1542
    %v1813 = vpack.c.b16 %v1553, %v1543
    %v1814 = vpack.c.b16 %v1554, %v1544
    %v1815 = vpack.c.b16 %v1555, %v1545
    %v1816 = vpack.c.b16 %v1556, %v1546
    %v1817 = vpack.c.b16 %v1567, %v1557
    %v1818 = vpack.c.b16 %v1568, %v1558
    %v1819 = vpack.c.b16 %v1569, %v1559
    %v1820 = vpack.c.b16 %v1570, %v1560
    %v1821 = vpack.c.b16 %v1571, %v1561
    %v1822 = vpack.c.b16 %v1572, %v1562
    %v1823 = vpack.c.b16 %v1573, %v1563
    %v1824 = vpack.c.b16 %v1574, %v1564
    %v1825 = vpack.c.b16 %v1575, %v1565
    %v1826 = vpack.c.b16 %v1576, %v1566
    %v1827 = vpack.c.b16 %v1587, %v1577
    %v1828 = vpack.c.b16 %v1588, %v1578
    %v1829 = vpack.c.b16 %v1589, %v1579
    %v1830 = vpack.c.b16 %v1590, %v1580
    %v1831 = vpack.c.b16 %v1591, %v1581
    %v1832 = vpack.c.b16 %v1592, %v1582
    %v1833 = vpack.c.b16 %v1593, %v1583
    %v1834 = vpack.c.b16 %v1594, %v1584
    %v1835 = vpack.c.b16 %v1595, %v1585
    %v1836 = vpack.c.b16 %v1596, %v1586
    %v1837 = vpack.c.b16 %v1607, %v1597
    %v1838 = vpack.c.b16 %v1608, %v1598
    %v1839 = vpack.c.b16 %v1609, %v1599
    %v1840 = vpack.c.b16 %v1610, %v1600
    %v1841 = vpack.c.b16 %v1611, %v1601
    %v1842 = vpack.c.b16 %v1612, %v1602
    %v1843 = vpack.c.b16 %v1613, %v1603
    %v1844 = vpack.c.b16 %v1614, %v1604
    %v1845 = vpack.c.b16 %v1615, %v1605
    %v1846 = vpack.c.b16 %v1616, %v1606
    %v1847 = vpack.c.b16 %v1627, %v1617
    %v1848 = vpack.c.b16 %v1628, %v1618
    %v1849 = vpack.c.b16 %v1629, %v1619
    %v1850 = vpack.c.b16 %v1630, %v1620
    %v1851 = vpack.c.b16 %v1631, %v1621
    %v1852 = vpack.c.b16 %v1632, %v1622
    %v1853 = vpack.c.b16 %v1633, %v1623
    %v1854 = vpack.c.b16 %v1634, %v1624
    %v1855 = vpack.c.b16 %v1635, %v1625
    %v1856 = vpack.c.b16 %v1636, %v1626
    %v1857 = vpack.c.b16 %v1647, %v1637
    %v1858 = vpack.c.b16 %v1648, %v1638
    %v1859 = vpack.c.b16 %v1649, %v1639
    %v1860 = vpack.c.b16 %v1650, %v1640
    %v1861 = vpack.c.b16 %v1651, %v1641
    %v1862 = vpack.c.b16 %v1652, %v1642
    %v1863 = vpack.c.b16 %v1653, %v1643
    %v1864 = vpack.c.b16 %v1654, %v1644
    %v1865 = vpack.c.b16 %v1655, %v1645
    %v1866 = vpack.c.b16 %v1656, %v1646
    %v1867 = vpack.c.b16 %v1667, %v1657
    %v1868 = vpack.c.b16 %v1668, %v1658
    %v1869 = vpack.c.b16 %v1669, %v1659
    %v1870 = vpack.c.b16 %v1670, %v1660
    %v1871 = vpack.c.b16 %v1671, %v1661
    %v1872 = vpack.c.b16 %v1672, %v1662
    %v1873 = vpack.c.b16 %v1673, %v1663
    %v1874 = vpack.c.b16 %v1674, %v1664
    %v1875 = vpack.c.b16 %v1675, %v1665
    %v1876 = vpack.c.b16 %v1676, %v1666
    %v1877 = vpack.c.b16 %v1687, %v1677
    %v1878 = vpack.c.b16 %v1688, %v1678
    %v1879 = vpack.c.b16 %v1689, %v1679
    %v1880 = vpack.c.b16 %v1690, %v1680
    %v1881 = vpack.c.b16 %v1691, %v1681
    %v1882 = vpack.c.b16 %v1692, %v1682
    %v1883 = vpack.c.b16 %v1693, %v1683
    %v1884 = vpack.c.b16 %v1694, %v1684
    %v1885 = vpack.c.b16 %v1695, %v1685
    %v1886 = vpack.c.b16 %v1696, %v1686
    %v1887 = vpack.c.b16 %v1707, %v1697
    %v1888 = vpack.c.b16 %v1708, %v1698
    %v1889 = vpack.c.b16 %v1709, %v1699
    %v1890 = vpack.c.b16 %v1710, %v1700
    %v1891 = vpack.c.b16 %v1711, %v1701
    %v1892 = vpack.c.b16 %v1712, %v1702
    %v1893 = vpack.c.b16 %v1713, %v1703
    %v1894 = vpack.c.b16 %v1714, %v1704
    %v1895 = vpack.c.b16 %v1715, %v1705
    %v1896 = vpack.c.b16 %v1716, %v1706
    %v1897 = vpack.c.b16 %v1727, %v1717
    %v1898 = vpack.c.b16 %v1728, %v1718
    %v1899 = vpack.c.b16 %v1729, %v1719
    %v1900 = vpack.c.b16 %v1730, %v1720
    %v1901 = vpack.c.b16 %v1731, %v1721
    %v1902 = vpack.c.b16 %v1732, %v1722
    %v1903 = vpack.c.b16 %v1733, %v1723
    %v1904 = vpack.c.b16 %v1734, %v1724
    %v1905 = vpack.c.b16 %v1735, %v1725
    %v1906 = vpack.c.b16 %v1736, %v1726
    %v1907 = vpack.c.b16 %v1747, %v1737
    %v1908 = vpack.c.b16 %v1748, %v1738
    %v1909 = vpack.c.b16 %v1749, %v1739
    %v1910 = vpack.c.b16 %v1750, %v1740
    %v1911 = vpack.c.b16 %v1751, %v1741
    %v1912 = vpack.c.b16 %v1752, %v1742
    %v1913 = vpack.c.b16 %v1753, %v1743
    %v1914 = vpack.c.b16 %v1754, %v1744
    %v1915 = vpack.c.b16 %v1755, %v1745
    %v1916 = vpack.c.b16 %v1756, %v1746
    %2077 = vmatprep.subr.bf16.mxu0 %v1758
    %2078 = vmatpush1.bf16.msra.mxu0 %v1757
    %2079 = vmatprep.subr.bf16.mxu0 %v1768
    %2080 = vmatpush1.bf16.msra.mxu0 %v1767
    %2081 = vmatprep.subr.bf16.mxu0 %v1778
    %2082 = vmatpush1.bf16.msra.mxu0 %v1777
    %2083 = vmatprep.subr.bf16.mxu0 %v1788
    %2084 = vmatpush1.bf16.msra.mxu0 %v1787
    %2085 = vmatprep.subr.bf16.mxu0 %v1798
    %2086 = vmatpush1.bf16.msra.mxu0 %v1797
    %2087 = vmatprep.subr.bf16.mxu0 %v1808
    %2088 = vmatpush1.bf16.msra.mxu0 %v1807
    %2089 = vmatprep.subr.bf16.mxu0 %v1818
    %2090 = vmatpush1.bf16.msra.mxu0 %v1817
    %2091 = vmatprep.subr.bf16.mxu0 %v1828
    %2092 = vmatpush1.bf16.msra.mxu0 %v1827
    %2093 = vmatprep.subr.bf16.mxu0 %v1838
    %2094 = vmatpush1.bf16.msra.mxu0 %v1837
    %2095 = vmatprep.subr.bf16.mxu0 %v1848
    %2096 = vmatpush1.bf16.msra.mxu0 %v1847
    %2097 = vmatprep.subr.bf16.mxu0 %v1858
    %2098 = vmatpush1.bf16.msra.mxu0 %v1857
    %2099 = vmatprep.subr.bf16.mxu0 %v1868
    %2100 = vmatpush1.bf16.msra.mxu0 %v1867
    %2101 = vmatprep.subr.bf16.mxu0 %v1878
    %2102 = vmatpush1.bf16.msra.mxu0 %v1877
    %2103 = vmatprep.subr.bf16.mxu0 %v1888
    %2104 = vmatpush1.bf16.msra.mxu0 %v1887
    %2105 = vmatprep.subr.bf16.mxu0 %v1898
    %2106 = vmatpush1.bf16.msra.mxu0 %v1897
    %2107 = vmatprep.subr.bf16.mxu0 %v1908
    %2108 = vmatpush1.bf16.msra.mxu0 %v1907
    %2109 = vmatprep.mubr.bf16.mxu0 %v1062
    %2110 = vmatmul.mubr.bf16.gmra.mrb[0].mxu0 %v1061
    %v2111 = vpop.f32.mrb[0].mxu0
    %v2112 = vadd.f32 %v1230, %v2111
    %v2113 = vpop.f32.mrb[0].mxu0
    %v2114 = vadd.f32 %v1234, %v2113
    %v2115 = vpop.f32.mrb[0].mxu0
    %v2116 = vpop.f32.mrb[0].mxu0
    %2117 = vdwg.mxu0
    %2118 = vmatprep.subr.bf16.mxu0 %v1760
    %2119 = vmatpush1.bf16.msra.mxu0 %v1759
    %2120 = vmatprep.subr.bf16.mxu0 %v1770
    %2121 = vmatpush1.bf16.msra.mxu0 %v1769
    %2122 = vmatprep.subr.bf16.mxu0 %v1780
    %2123 = vmatpush1.bf16.msra.mxu0 %v1779
    %2124 = vmatprep.subr.bf16.mxu0 %v1790
    %2125 = vmatpush1.bf16.msra.mxu0 %v1789
    %2126 = vmatprep.subr.bf16.mxu0 %v1800
    %2127 = vmatpush1.bf16.msra.mxu0 %v1799
    %2128 = vmatprep.subr.bf16.mxu0 %v1810
    %2129 = vmatpush1.bf16.msra.mxu0 %v1809
    %2130 = vmatprep.subr.bf16.mxu0 %v1820
    %2131 = vmatpush1.bf16.msra.mxu0 %v1819
    %2132 = vmatprep.subr.bf16.mxu0 %v1830
    %2133 = vmatpush1.bf16.msra.mxu0 %v1829
    %2134 = vmatprep.subr.bf16.mxu0 %v1840
    %2135 = vmatpush1.bf16.msra.mxu0 %v1839
    %2136 = vmatprep.subr.bf16.mxu0 %v1850
    %2137 = vmatpush1.bf16.msra.mxu0 %v1849
    %2138 = vmatprep.subr.bf16.mxu0 %v1860
    %2139 = vmatpush1.bf16.msra.mxu0 %v1859
    %2140 = vmatprep.subr.bf16.mxu0 %v1870
    %2141 = vmatpush1.bf16.msra.mxu0 %v1869
    %2142 = vmatprep.subr.bf16.mxu0 %v1880
    %2143 = vmatpush1.bf16.msra.mxu0 %v1879
    %2144 = vmatprep.subr.bf16.mxu0 %v1890
    %2145 = vmatpush1.bf16.msra.mxu0 %v1889
    %2146 = vmatprep.subr.bf16.mxu0 %v1900
    %2147 = vmatpush1.bf16.msra.mxu0 %v1899
    %2148 = vmatprep.subr.bf16.mxu0 %v1910
    %2149 = vmatpush1.bf16.msra.mxu0 %v1909
    %2150 = vmatprep.mubr.bf16.mxu0 %v1062
    %2151 = vmatmul.mubr.bf16.gmra.mrb[0].mxu0 %v1061
    %v2152 = vpop.f32.mrb[0].mxu0
    %v2153 = vadd.f32 %v1238, %v2152
    %v2154 = vpop.f32.mrb[0].mxu0
    %v2155 = vadd.f32 %v1242, %v2154
    %v2156 = vpop.f32.mrb[0].mxu0
    %v2157 = vpop.f32.mrb[0].mxu0
    %2158 = vdwg.mxu0
    %2159 = vmatprep.subr.bf16.mxu0 %v1762
    %2160 = vmatpush1.bf16.msra.mxu0 %v1761
    %2161 = vmatprep.subr.bf16.mxu0 %v1772
    %2162 = vmatpush1.bf16.msra.mxu0 %v1771
    %2163 = vmatprep.subr.bf16.mxu0 %v1782
    %2164 = vmatpush1.bf16.msra.mxu0 %v1781
    %2165 = vmatprep.subr.bf16.mxu0 %v1792
    %2166 = vmatpush1.bf16.msra.mxu0 %v1791
    %2167 = vmatprep.subr.bf16.mxu0 %v1802
    %2168 = vmatpush1.bf16.msra.mxu0 %v1801
    %2169 = vmatprep.subr.bf16.mxu0 %v1812
    %2170 = vmatpush1.bf16.msra.mxu0 %v1811
    %2171 = vmatprep.subr.bf16.mxu0 %v1822
    %2172 = vmatpush1.bf16.msra.mxu0 %v1821
    %2173 = vmatprep.subr.bf16.mxu0 %v1832
    %2174 = vmatpush1.bf16.msra.mxu0 %v1831
    %2175 = vmatprep.subr.bf16.mxu0 %v1842
    %2176 = vmatpush1.bf16.msra.mxu0 %v1841
    %2177 = vmatprep.subr.bf16.mxu0 %v1852
    %2178 = vmatpush1.bf16.msra.mxu0 %v1851
    %2179 = vmatprep.subr.bf16.mxu0 %v1862
    %2180 = vmatpush1.bf16.msra.mxu0 %v1861
    %2181 = vmatprep.subr.bf16.mxu0 %v1872
    %2182 = vmatpush1.bf16.msra.mxu0 %v1871
    %2183 = vmatprep.subr.bf16.mxu0 %v1882
    %2184 = vmatpush1.bf16.msra.mxu0 %v1881
    %2185 = vmatprep.subr.bf16.mxu0 %v1892
    %2186 = vmatpush1.bf16.msra.mxu0 %v1891
    %2187 = vmatprep.subr.bf16.mxu0 %v1902
    %2188 = vmatpush1.bf16.msra.mxu0 %v1901
    %2189 = vmatprep.subr.bf16.mxu0 %v1912
    %2190 = vmatpush1.bf16.msra.mxu0 %v1911
    %2191 = vmatprep.mubr.bf16.mxu0 %v1062
    %2192 = vmatmul.mubr.bf16.gmra.mrb[0].mxu0 %v1061
    %v2193 = vpop.f32.mrb[0].mxu0
    %v2194 = vadd.f32 %v1246, %v2193
    %v2195 = vpop.f32.mrb[0].mxu0
    %v2196 = vadd.f32 %v1250, %v2195
    %v2197 = vpop.f32.mrb[0].mxu0
    %v2198 = vpop.f32.mrb[0].mxu0
    %2199 = vdwg.mxu0
    %2200 = vmatprep.subr.bf16.mxu0 %v1764
    %2201 = vmatpush1.bf16.msra.mxu0 %v1763
    %2202 = vmatprep.subr.bf16.mxu0 %v1774
    %2203 = vmatpush1.bf16.msra.mxu0 %v1773
    %2204 = vmatprep.subr.bf16.mxu0 %v1784
    %2205 = vmatpush1.bf16.msra.mxu0 %v1783
    %2206 = vmatprep.subr.bf16.mxu0 %v1794
    %2207 = vmatpush1.bf16.msra.mxu0 %v1793
    %2208 = vmatprep.subr.bf16.mxu0 %v1804
    %2209 = vmatpush1.bf16.msra.mxu0 %v1803
    %2210 = vmatprep.subr.bf16.mxu0 %v1814
    %2211 = vmatpush1.bf16.msra.mxu0 %v1813
    %2212 = vmatprep.subr.bf16.mxu0 %v1824
    %2213 = vmatpush1.bf16.msra.mxu0 %v1823
    %2214 = vmatprep.subr.bf16.mxu0 %v1834
    %2215 = vmatpush1.bf16.msra.mxu0 %v1833
    %2216 = vmatprep.subr.bf16.mxu0 %v1844
    %2217 = vmatpush1.bf16.msra.mxu0 %v1843
    %2218 = vmatprep.subr.bf16.mxu0 %v1854
    %2219 = vmatpush1.bf16.msra.mxu0 %v1853
    %2220 = vmatprep.subr.bf16.mxu0 %v1864
    %2221 = vmatpush1.bf16.msra.mxu0 %v1863
    %2222 = vmatprep.subr.bf16.mxu0 %v1874
    %2223 = vmatpush1.bf16.msra.mxu0 %v1873
    %2224 = vmatprep.subr.bf16.mxu0 %v1884
    %2225 = vmatpush1.bf16.msra.mxu0 %v1883
    %2226 = vmatprep.subr.bf16.mxu0 %v1894
    %2227 = vmatpush1.bf16.msra.mxu0 %v1893
    %2228 = vmatprep.subr.bf16.mxu0 %v1904
    %2229 = vmatpush1.bf16.msra.mxu0 %v1903
    %2230 = vmatprep.subr.bf16.mxu0 %v1914
    %2231 = vmatpush1.bf16.msra.mxu0 %v1913
    %2232 = vmatprep.mubr.bf16.mxu0 %v1062
    %2233 = vmatmul.mubr.bf16.gmra.mrb[0].mxu0 %v1061
    %v2234 = vpop.f32.mrb[0].mxu0
    %v2235 = vadd.f32 %v1254, %v2234
    %v2236 = vpop.f32.mrb[0].mxu0
    %v2237 = vadd.f32 %v1258, %v2236
    %v2238 = vpop.f32.mrb[0].mxu0
    %v2239 = vpop.f32.mrb[0].mxu0
    %2240 = vdwg.mxu0
    %2241 = vmatprep.subr.bf16.mxu0 %v1766
    %2242 = vmatpush1.bf16.msra.mxu0 %v1765
    %2243 = vmatprep.subr.bf16.mxu0 %v1776
    %2244 = vmatpush1.bf16.msra.mxu0 %v1775
    %2245 = vmatprep.subr.bf16.mxu0 %v1786
    %2246 = vmatpush1.bf16.msra.mxu0 %v1785
    %2247 = vmatprep.subr.bf16.mxu0 %v1796
    %2248 = vmatpush1.bf16.msra.mxu0 %v1795
    %2249 = vmatprep.subr.bf16.mxu0 %v1806
    %2250 = vmatpush1.bf16.msra.mxu0 %v1805
    %2251 = vmatprep.subr.bf16.mxu0 %v1816
    %2252 = vmatpush1.bf16.msra.mxu0 %v1815
    %2253 = vmatprep.subr.bf16.mxu0 %v1826
    %2254 = vmatpush1.bf16.msra.mxu0 %v1825
    %2255 = vmatprep.subr.bf16.mxu0 %v1836
    %2256 = vmatpush1.bf16.msra.mxu0 %v1835
    %2257 = vmatprep.subr.bf16.mxu0 %v1846
    %2258 = vmatpush1.bf16.msra.mxu0 %v1845
    %2259 = vmatprep.subr.bf16.mxu0 %v1856
    %2260 = vmatpush1.bf16.msra.mxu0 %v1855
    %2261 = vmatprep.subr.bf16.mxu0 %v1866
    %2262 = vmatpush1.bf16.msra.mxu0 %v1865
    %2263 = vmatprep.subr.bf16.mxu0 %v1876
    %2264 = vmatpush1.bf16.msra.mxu0 %v1875
    %2265 = vmatprep.subr.bf16.mxu0 %v1886
    %2266 = vmatpush1.bf16.msra.mxu0 %v1885
    %2267 = vmatprep.subr.bf16.mxu0 %v1896
    %2268 = vmatpush1.bf16.msra.mxu0 %v1895
    %2269 = vmatprep.subr.bf16.mxu0 %v1906
    %2270 = vmatpush1.bf16.msra.mxu0 %v1905
    %2271 = vmatprep.subr.bf16.mxu0 %v1916
    %2272 = vmatpush1.bf16.msra.mxu0 %v1915
    %2273 = vmatprep.mubr.bf16.mxu0 %v1062
    %2274 = vmatmul.mubr.bf16.gmra.mrb[0].mxu0 %v1061
    %v2275 = vpop.f32.mrb[0].mxu0
    %v2276 = vadd.f32 %v1262, %v2275
    %v2277 = vpop.f32.mrb[0].mxu0
    %v2278 = vadd.f32 %v1266, %v2277
    %v2279 = vpop.f32.mrb[0].mxu0
    %v2280 = vpop.f32.mrb[0].mxu0
    %2281 = vdwg.mxu0
    %v2282 = vmax.f32 %v2112, 0.0
    %v2283 = vmax.f32 %v2114, 0.0
    %v2284 = vmax.f32 %v2153, 0.0
    %v2285 = vmax.f32 %v2155, 0.0
    %v2286 = vmax.f32 %v2194, 0.0
    %v2287 = vmax.f32 %v2196, 0.0
    %v2288 = vmax.f32 %v2235, 0.0
    %v2289 = vmax.f32 %v2237, 0.0
    %v2290 = vmax.f32 %v2276, 0.0
    %v2291 = vmax.f32 %v2278, 0.0
    %v2292 = vpack.c.bf16 %v2282, %v2282
    %v2293 = vpack.c.bf16 %v2283, %v2283
    %v2294 = vpack.c.bf16 %v2284, %v2284
    %v2295 = vpack.c.bf16 %v2285, %v2285
    %v2296 = vpack.c.bf16 %v2286, %v2286
    %v2297 = vpack.c.bf16 %v2287, %v2287
    %v2298 = vpack.c.bf16 %v2288, %v2288
    %v2299 = vpack.c.bf16 %v2289, %v2289
    %v2300 = vpack.c.bf16 %v2290, %v2290
    %v2301 = vpack.c.bf16 %v2291, %v2291
    %v2302 = vld [vmem:[%s5] sm:$0xf]
    %v2303 = vld [vmem:[%s5 + $0x4] sm:$0xf]
    %v2304 = vld [vmem:[%s5 + $0x8] sm:$0xf]
    %v2305 = vld [vmem:[%s5 + $0xc] sm:$0xf]
    %v2306 = vld [vmem:[%s5 + $0x10] sm:$0xf]
    %v2307 = vld [vmem:[%s5 + $0x14] sm:$0xf]
    %v2308 = vld [vmem:[%s5 + $0x18] sm:$0xf]
    %v2309 = vld [vmem:[%s5 + $0x1c] sm:$0xf]
    %v2310 = vld [vmem:[%s5 + $0x20] sm:$0xf]
    %v2311 = vld [vmem:[%s5 + $0x24] sm:$0xf]
    %v2312 = vld [vmem:[%s5 + $0x28] sm:$0xf]
    %v2313 = vld [vmem:[%s5 + $0x2c] sm:$0xf]
    %v2314 = vld [vmem:[%s5 + $0x30] sm:$0xf]
    %v2315 = vld [vmem:[%s5 + $0x34] sm:$0xf]
    %v2316 = vld [vmem:[%s5 + $0x38] sm:$0xf]
    %v2317 = vld [vmem:[%s5 + $0x3c] sm:$0xf]
    %v2318 = vld [vmem:[%s5 + $0x40] sm:$0xf]
    %v2319 = vld [vmem:[%s5 + $0x44] sm:$0xf]
    %v2320 = vld [vmem:[%s5 + $0x48] sm:$0xf]
    %v2321 = vld [vmem:[%s5 + $0x4c] sm:$0xf]
    %v2322 = vld [vmem:[%s5 + $0x50] sm:$0xf]
    %v2323 = vld [vmem:[%s5 + $0x54] sm:$0xf]
    %v2324 = vld [vmem:[%s5 + $0x58] sm:$0xf]
    %v2325 = vld [vmem:[%s5 + $0x5c] sm:$0xf]
    %v2326 = vld [vmem:[%s5 + $0x60] sm:$0xf]
    %v2327 = vld [vmem:[%s5 + $0x64] sm:$0xf]
    %v2328 = vld [vmem:[%s5 + $0x68] sm:$0xf]
    %v2329 = vld [vmem:[%s5 + $0x6c] sm:$0xf]
    %v2330 = vld [vmem:[%s5 + $0x70] sm:$0xf]
    %v2331 = vld [vmem:[%s5 + $0x74] sm:$0xf]
    %v2332 = vld [vmem:[%s5 + $0x78] sm:$0xf]
    %v2333 = vld [vmem:[%s5 + $0x7c] sm:$0xf]
    %v2334 = vld [vmem:[%s5 + $0x80] sm:$0xf]
    %v2335 = vld [vmem:[%s5 + $0x84] sm:$0xf]
    %v2336 = vld [vmem:[%s5 + $0x88] sm:$0xf]
    %v2337 = vld [vmem:[%s5 + $0x8c] sm:$0xf]
    %v2338 = vld [vmem:[%s5 + $0x90] sm:$0xf]
    %v2339 = vld [vmem:[%s5 + $0x94] sm:$0xf]
    %v2340 = vld [vmem:[%s5 + $0x98] sm:$0xf]
    %v2341 = vld [vmem:[%s5 + $0x9c] sm:$0xf]
    %v2342 = vld [vmem:[%s5 + $0xa0] sm:$0xf]
    %v2343 = vld [vmem:[%s5 + $0xa4] sm:$0xf]
    %v2344 = vld [vmem:[%s5 + $0xa8] sm:$0xf]
    %v2345 = vld [vmem:[%s5 + $0xac] sm:$0xf]
    %v2346 = vld [vmem:[%s5 + $0xb0] sm:$0xf]
    %v2347 = vld [vmem:[%s5 + $0xb4] sm:$0xf]
    %v2348 = vld [vmem:[%s5 + $0xb8] sm:$0xf]
    %v2349 = vld [vmem:[%s5 + $0xbc] sm:$0xf]
    %v2350 = vld [vmem:[%s5 + $0xc0] sm:$0xf]
    %v2351 = vld [vmem:[%s5 + $0xc4] sm:$0xf]
    %v2352 = vld [vmem:[%s5 + $0xc8] sm:$0xf]
    %v2353 = vld [vmem:[%s5 + $0xcc] sm:$0xf]
    %v2354 = vld [vmem:[%s5 + $0xd0] sm:$0xf]
    %v2355 = vld [vmem:[%s5 + $0xd4] sm:$0xf]
    %v2356 = vld [vmem:[%s5 + $0xd8] sm:$0xf]
    %v2357 = vld [vmem:[%s5 + $0xdc] sm:$0xf]
    %v2358 = vld [vmem:[%s5 + $0xe0] sm:$0xf]
    %v2359 = vld [vmem:[%s5 + $0xe4] sm:$0xf]
    %v2360 = vld [vmem:[%s5 + $0xe8] sm:$0xf]
    %v2361 = vld [vmem:[%s5 + $0xec] sm:$0xf]
    %v2362 = vld [vmem:[%s5 + $0xf0] sm:$0xf]
    %v2363 = vld [vmem:[%s5 + $0xf4] sm:$0xf]
    %v2364 = vld [vmem:[%s5 + $0xf8] sm:$0xf]
    %v2365 = vld [vmem:[%s5 + $0xfc] sm:$0xf]
    %v2366 = vld [vmem:[%s5 + $0x100] sm:$0xf]
    %v2367 = vld [vmem:[%s5 + $0x104] sm:$0xf]
    %v2368 = vld [vmem:[%s5 + $0x108] sm:$0xf]
    %v2369 = vld [vmem:[%s5 + $0x10c] sm:$0xf]
    %v2370 = vld [vmem:[%s5 + $0x110] sm:$0xf]
    %v2371 = vld [vmem:[%s5 + $0x114] sm:$0xf]
    %v2372 = vld [vmem:[%s5 + $0x118] sm:$0xf]
    %v2373 = vld [vmem:[%s5 + $0x11c] sm:$0xf]
    %v2374 = vld [vmem:[%s5 + $0x120] sm:$0xf]
    %v2375 = vld [vmem:[%s5 + $0x124] sm:$0xf]
    %v2376 = vld [vmem:[%s5 + $0x128] sm:$0xf]
    %v2377 = vld [vmem:[%s5 + $0x12c] sm:$0xf]
    %v2378 = vld [vmem:[%s5 + $0x130] sm:$0xf]
    %v2379 = vld [vmem:[%s5 + $0x134] sm:$0xf]
    %v2380 = vld [vmem:[%s5 + $0x138] sm:$0xf]
    %v2381 = vld [vmem:[%s5 + $0x13c] sm:$0xf]
    %v2382 = vld [vmem:[%s5 + $0x140] sm:$0xf]
    %v2383 = vld [vmem:[%s5 + $0x144] sm:$0xf]
    %v2384 = vld [vmem:[%s5 + $0x148] sm:$0xf]
    %v2385 = vld [vmem:[%s5 + $0x14c] sm:$0xf]
    %v2386 = vld [vmem:[%s5 + $0x150] sm:$0xf]
    %v2387 = vld [vmem:[%s5 + $0x154] sm:$0xf]
    %v2388 = vld [vmem:[%s5 + $0x158] sm:$0xf]
    %v2389 = vld [vmem:[%s5 + $0x15c] sm:$0xf]
    %v2390 = vld [vmem:[%s5 + $0x160] sm:$0xf]
    %v2391 = vld [vmem:[%s5 + $0x164] sm:$0xf]
    %v2392 = vld [vmem:[%s5 + $0x168] sm:$0xf]
    %v2393 = vld [vmem:[%s5 + $0x16c] sm:$0xf]
    %v2394 = vld [vmem:[%s5 + $0x170] sm:$0xf]
    %v2395 = vld [vmem:[%s5 + $0x174] sm:$0xf]
    %v2396 = vld [vmem:[%s5 + $0x178] sm:$0xf]
    %v2397 = vld [vmem:[%s5 + $0x17c] sm:$0xf]
    %v2398 = vld [vmem:[%s5 + $0x180] sm:$0xf]
    %v2399 = vld [vmem:[%s5 + $0x184] sm:$0xf]
    %v2400 = vld [vmem:[%s5 + $0x188] sm:$0xf]
    %v2401 = vld [vmem:[%s5 + $0x18c] sm:$0xf]
    %v2402 = vld [vmem:[%s5 + $0x190] sm:$0xf]
    %v2403 = vld [vmem:[%s5 + $0x194] sm:$0xf]
    %v2404 = vld [vmem:[%s5 + $0x198] sm:$0xf]
    %v2405 = vld [vmem:[%s5 + $0x19c] sm:$0xf]
    %v2406 = vld [vmem:[%s5 + $0x1a0] sm:$0xf]
    %v2407 = vld [vmem:[%s5 + $0x1a4] sm:$0xf]
    %v2408 = vld [vmem:[%s5 + $0x1a8] sm:$0xf]
    %v2409 = vld [vmem:[%s5 + $0x1ac] sm:$0xf]
    %v2410 = vld [vmem:[%s5 + $0x1b0] sm:$0xf]
    %v2411 = vld [vmem:[%s5 + $0x1b4] sm:$0xf]
    %v2412 = vld [vmem:[%s5 + $0x1b8] sm:$0xf]
    %v2413 = vld [vmem:[%s5 + $0x1bc] sm:$0xf]
    %v2414 = vld [vmem:[%s5 + $0x1c0] sm:$0xf]
    %v2415 = vld [vmem:[%s5 + $0x1c4] sm:$0xf]
    %v2416 = vld [vmem:[%s5 + $0x1c8] sm:$0xf]
    %v2417 = vld [vmem:[%s5 + $0x1cc] sm:$0xf]
    %v2418 = vld [vmem:[%s5 + $0x1d0] sm:$0xf]
    %v2419 = vld [vmem:[%s5 + $0x1d4] sm:$0xf]
    %v2420 = vld [vmem:[%s5 + $0x1d8] sm:$0xf]
    %v2421 = vld [vmem:[%s5 + $0x1dc] sm:$0xf]
    %v2422 = vld [vmem:[%s5 + $0x1e0] sm:$0xf]
    %v2423 = vld [vmem:[%s5 + $0x1e4] sm:$0xf]
    %v2424 = vld [vmem:[%s5 + $0x1e8] sm:$0xf]
    %v2425 = vld [vmem:[%s5 + $0x1ec] sm:$0xf]
    %v2426 = vld [vmem:[%s5 + $0x1f0] sm:$0xf]
    %v2427 = vld [vmem:[%s5 + $0x1f4] sm:$0xf]
    %v2428 = vld [vmem:[%s5 + $0x1f8] sm:$0xf]
    %v2429 = vld [vmem:[%s5 + $0x1fc] sm:$0xf]
    %v2430 = vld [vmem:[%s5 + $0x200] sm:$0xf]
    %v2431 = vld [vmem:[%s5 + $0x204] sm:$0xf]
    %v2432 = vld [vmem:[%s5 + $0x208] sm:$0xf]
    %v2433 = vld [vmem:[%s5 + $0x20c] sm:$0xf]
    %v2434 = vld [vmem:[%s5 + $0x210] sm:$0xf]
    %v2435 = vld [vmem:[%s5 + $0x214] sm:$0xf]
    %v2436 = vld [vmem:[%s5 + $0x218] sm:$0xf]
    %v2437 = vld [vmem:[%s5 + $0x21c] sm:$0xf]
    %v2438 = vld [vmem:[%s5 + $0x220] sm:$0xf]
    %v2439 = vld [vmem:[%s5 + $0x224] sm:$0xf]
    %v2440 = vld [vmem:[%s5 + $0x228] sm:$0xf]
    %v2441 = vld [vmem:[%s5 + $0x22c] sm:$0xf]
    %v2442 = vld [vmem:[%s5 + $0x230] sm:$0xf]
    %v2443 = vld [vmem:[%s5 + $0x234] sm:$0xf]
    %v2444 = vld [vmem:[%s5 + $0x238] sm:$0xf]
    %v2445 = vld [vmem:[%s5 + $0x23c] sm:$0xf]
    %v2446 = vld [vmem:[%s5 + $0x240] sm:$0xf]
    %v2447 = vld [vmem:[%s5 + $0x244] sm:$0xf]
    %v2448 = vld [vmem:[%s5 + $0x248] sm:$0xf]
    %v2449 = vld [vmem:[%s5 + $0x24c] sm:$0xf]
    %v2450 = vld [vmem:[%s5 + $0x250] sm:$0xf]
    %v2451 = vld [vmem:[%s5 + $0x254] sm:$0xf]
    %v2452 = vld [vmem:[%s5 + $0x258] sm:$0xf]
    %v2453 = vld [vmem:[%s5 + $0x25c] sm:$0xf]
    %v2454 = vld [vmem:[%s5 + $0x260] sm:$0xf]
    %v2455 = vld [vmem:[%s5 + $0x264] sm:$0xf]
    %v2456 = vld [vmem:[%s5 + $0x268] sm:$0xf]
    %v2457 = vld [vmem:[%s5 + $0x26c] sm:$0xf]
    %v2458 = vld [vmem:[%s5 + $0x270] sm:$0xf]
    %v2459 = vld [vmem:[%s5 + $0x274] sm:$0xf]
    %v2460 = vld [vmem:[%s5 + $0x278] sm:$0xf]
    %v2461 = vld [vmem:[%s5 + $0x27c] sm:$0xf]
    %v2462 = vld [vmem:[%s6] sm:$0x1]
    %v2464 = vlaneseq
    %v2465 = vshrl.u32 %v2464, 7
    %v2466 = vsub.s32 0, %v2465
    %v2467 = vrot.slane %v2462, %v2466
    %v2629 = vunpack.c.l.b16 %v2302
    %v2630 = vunpack.c.l.b16 %v2303
    %v2631 = vunpack.c.l.b16 %v2304
    %v2632 = vunpack.c.l.b16 %v2305
    %v2633 = vunpack.c.l.b16 %v2306
    %v2634 = vunpack.c.l.b16 %v2307
    %v2635 = vunpack.c.l.b16 %v2308
    %v2636 = vunpack.c.l.b16 %v2309
    %v2637 = vunpack.c.l.b16 %v2310
    %v2638 = vunpack.c.l.b16 %v2311
    %v2639 = vunpack.c.l.b16 %v2312
    %v2640 = vunpack.c.l.b16 %v2313
    %v2641 = vunpack.c.l.b16 %v2314
    %v2642 = vunpack.c.l.b16 %v2315
    %v2643 = vunpack.c.l.b16 %v2316
    %v2644 = vunpack.c.l.b16 %v2317
    %v2645 = vunpack.c.l.b16 %v2318
    %v2646 = vunpack.c.l.b16 %v2319
    %v2647 = vunpack.c.l.b16 %v2320
    %v2648 = vunpack.c.l.b16 %v2321
    %v2649 = vunpack.c.l.b16 %v2322
    %v2650 = vunpack.c.l.b16 %v2323
    %v2651 = vunpack.c.l.b16 %v2324
    %v2652 = vunpack.c.l.b16 %v2325
    %v2653 = vunpack.c.l.b16 %v2326
    %v2654 = vunpack.c.l.b16 %v2327
    %v2655 = vunpack.c.l.b16 %v2328
    %v2656 = vunpack.c.l.b16 %v2329
    %v2657 = vunpack.c.l.b16 %v2330
    %v2658 = vunpack.c.l.b16 %v2331
    %v2659 = vunpack.c.l.b16 %v2332
    %v2660 = vunpack.c.l.b16 %v2333
    %v2661 = vunpack.c.l.b16 %v2334
    %v2662 = vunpack.c.l.b16 %v2335
    %v2663 = vunpack.c.l.b16 %v2336
    %v2664 = vunpack.c.l.b16 %v2337
    %v2665 = vunpack.c.l.b16 %v2338
    %v2666 = vunpack.c.l.b16 %v2339
    %v2667 = vunpack.c.l.b16 %v2340
    %v2668 = vunpack.c.l.b16 %v2341
    %v2669 = vunpack.c.l.b16 %v2342
    %v2670 = vunpack.c.l.b16 %v2343
    %v2671 = vunpack.c.l.b16 %v2344
    %v2672 = vunpack.c.l.b16 %v2345
    %v2673 = vunpack.c.l.b16 %v2346
    %v2674 = vunpack.c.l.b16 %v2347
    %v2675 = vunpack.c.l.b16 %v2348
    %v2676 = vunpack.c.l.b16 %v2349
    %v2677 = vunpack.c.l.b16 %v2350
    %v2678 = vunpack.c.l.b16 %v2351
    %v2679 = vunpack.c.l.b16 %v2352
    %v2680 = vunpack.c.l.b16 %v2353
    %v2681 = vunpack.c.l.b16 %v2354
    %v2682 = vunpack.c.l.b16 %v2355
    %v2683 = vunpack.c.l.b16 %v2356
    %v2684 = vunpack.c.l.b16 %v2357
    %v2685 = vunpack.c.l.b16 %v2358
    %v2686 = vunpack.c.l.b16 %v2359
    %v2687 = vunpack.c.l.b16 %v2360
    %v2688 = vunpack.c.l.b16 %v2361
    %v2689 = vunpack.c.l.b16 %v2362
    %v2690 = vunpack.c.l.b16 %v2363
    %v2691 = vunpack.c.l.b16 %v2364
    %v2692 = vunpack.c.l.b16 %v2365
    %v2693 = vunpack.c.l.b16 %v2366
    %v2694 = vunpack.c.l.b16 %v2367
    %v2695 = vunpack.c.l.b16 %v2368
    %v2696 = vunpack.c.l.b16 %v2369
    %v2697 = vunpack.c.l.b16 %v2370
    %v2698 = vunpack.c.l.b16 %v2371
    %v2699 = vunpack.c.l.b16 %v2372
    %v2700 = vunpack.c.l.b16 %v2373
    %v2701 = vunpack.c.l.b16 %v2374
    %v2702 = vunpack.c.l.b16 %v2375
    %v2703 = vunpack.c.l.b16 %v2376
    %v2704 = vunpack.c.l.b16 %v2377
    %v2705 = vunpack.c.l.b16 %v2378
    %v2706 = vunpack.c.l.b16 %v2379
    %v2707 = vunpack.c.l.b16 %v2380
    %v2708 = vunpack.c.l.b16 %v2381
    %v2709 = vunpack.c.l.b16 %v2382
    %v2710 = vunpack.c.l.b16 %v2383
    %v2711 = vunpack.c.l.b16 %v2384
    %v2712 = vunpack.c.l.b16 %v2385
    %v2713 = vunpack.c.l.b16 %v2386
    %v2714 = vunpack.c.l.b16 %v2387
    %v2715 = vunpack.c.l.b16 %v2388
    %v2716 = vunpack.c.l.b16 %v2389
    %v2717 = vunpack.c.l.b16 %v2390
    %v2718 = vunpack.c.l.b16 %v2391
    %v2719 = vunpack.c.l.b16 %v2392
    %v2720 = vunpack.c.l.b16 %v2393
    %v2721 = vunpack.c.l.b16 %v2394
    %v2722 = vunpack.c.l.b16 %v2395
    %v2723 = vunpack.c.l.b16 %v2396
    %v2724 = vunpack.c.l.b16 %v2397
    %v2725 = vunpack.c.l.b16 %v2398
    %v2726 = vunpack.c.l.b16 %v2399
    %v2727 = vunpack.c.l.b16 %v2400
    %v2728 = vunpack.c.l.b16 %v2401
    %v2729 = vunpack.c.l.b16 %v2402
    %v2730 = vunpack.c.l.b16 %v2403
    %v2731 = vunpack.c.l.b16 %v2404
    %v2732 = vunpack.c.l.b16 %v2405
    %v2733 = vunpack.c.l.b16 %v2406
    %v2734 = vunpack.c.l.b16 %v2407
    %v2735 = vunpack.c.l.b16 %v2408
    %v2736 = vunpack.c.l.b16 %v2409
    %v2737 = vunpack.c.l.b16 %v2410
    %v2738 = vunpack.c.l.b16 %v2411
    %v2739 = vunpack.c.l.b16 %v2412
    %v2740 = vunpack.c.l.b16 %v2413
    %v2741 = vunpack.c.l.b16 %v2414
    %v2742 = vunpack.c.l.b16 %v2415
    %v2743 = vunpack.c.l.b16 %v2416
    %v2744 = vunpack.c.l.b16 %v2417
    %v2745 = vunpack.c.l.b16 %v2418
    %v2746 = vunpack.c.l.b16 %v2419
    %v2747 = vunpack.c.l.b16 %v2420
    %v2748 = vunpack.c.l.b16 %v2421
    %v2749 = vunpack.c.l.b16 %v2422
    %v2750 = vunpack.c.l.b16 %v2423
    %v2751 = vunpack.c.l.b16 %v2424
    %v2752 = vunpack.c.l.b16 %v2425
    %v2753 = vunpack.c.l.b16 %v2426
    %v2754 = vunpack.c.l.b16 %v2427
    %v2755 = vunpack.c.l.b16 %v2428
    %v2756 = vunpack.c.l.b16 %v2429
    %v2757 = vunpack.c.l.b16 %v2430
    %v2758 = vunpack.c.l.b16 %v2431
    %v2759 = vunpack.c.l.b16 %v2432
    %v2760 = vunpack.c.l.b16 %v2433
    %v2761 = vunpack.c.l.b16 %v2434
    %v2762 = vunpack.c.l.b16 %v2435
    %v2763 = vunpack.c.l.b16 %v2436
    %v2764 = vunpack.c.l.b16 %v2437
    %v2765 = vunpack.c.l.b16 %v2438
    %v2766 = vunpack.c.l.b16 %v2439
    %v2767 = vunpack.c.l.b16 %v2440
    %v2768 = vunpack.c.l.b16 %v2441
    %v2769 = vunpack.c.l.b16 %v2442
    %v2770 = vunpack.c.l.b16 %v2443
    %v2771 = vunpack.c.l.b16 %v2444
    %v2772 = vunpack.c.l.b16 %v2445
    %v2773 = vunpack.c.l.b16 %v2446
    %v2774 = vunpack.c.l.b16 %v2447
    %v2775 = vunpack.c.l.b16 %v2448
    %v2776 = vunpack.c.l.b16 %v2449
    %v2777 = vunpack.c.l.b16 %v2450
    %v2778 = vunpack.c.l.b16 %v2451
    %v2779 = vunpack.c.l.b16 %v2452
    %v2780 = vunpack.c.l.b16 %v2453
    %v2781 = vunpack.c.l.b16 %v2454
    %v2782 = vunpack.c.l.b16 %v2455
    %v2783 = vunpack.c.l.b16 %v2456
    %v2784 = vunpack.c.l.b16 %v2457
    %v2785 = vunpack.c.l.b16 %v2458
    %v2786 = vunpack.c.l.b16 %v2459
    %v2787 = vunpack.c.l.b16 %v2460
    %v2788 = vunpack.c.l.b16 %v2461
    %v2789 = vpack.c.b16 %v2630, %v2629
    %v2790 = vpack.c.b16 %v2632, %v2631
    %v2791 = vpack.c.b16 %v2634, %v2633
    %v2792 = vpack.c.b16 %v2636, %v2635
    %v2793 = vpack.c.b16 %v2638, %v2637
    %v2794 = vpack.c.b16 %v2640, %v2639
    %v2795 = vpack.c.b16 %v2642, %v2641
    %v2796 = vpack.c.b16 %v2644, %v2643
    %v2797 = vpack.c.b16 %v2646, %v2645
    %v2798 = vpack.c.b16 %v2648, %v2647
    %v2799 = vpack.c.b16 %v2650, %v2649
    %v2800 = vpack.c.b16 %v2652, %v2651
    %v2801 = vpack.c.b16 %v2654, %v2653
    %v2802 = vpack.c.b16 %v2656, %v2655
    %v2803 = vpack.c.b16 %v2658, %v2657
    %v2804 = vpack.c.b16 %v2660, %v2659
    %v2805 = vpack.c.b16 %v2662, %v2661
    %v2806 = vpack.c.b16 %v2664, %v2663
    %v2807 = vpack.c.b16 %v2666, %v2665
    %v2808 = vpack.c.b16 %v2668, %v2667
    %v2809 = vpack.c.b16 %v2670, %v2669
    %v2810 = vpack.c.b16 %v2672, %v2671
    %v2811 = vpack.c.b16 %v2674, %v2673
    %v2812 = vpack.c.b16 %v2676, %v2675
    %v2813 = vpack.c.b16 %v2678, %v2677
    %v2814 = vpack.c.b16 %v2680, %v2679
    %v2815 = vpack.c.b16 %v2682, %v2681
    %v2816 = vpack.c.b16 %v2684, %v2683
    %v2817 = vpack.c.b16 %v2686, %v2685
    %v2818 = vpack.c.b16 %v2688, %v2687
    %v2819 = vpack.c.b16 %v2690, %v2689
    %v2820 = vpack.c.b16 %v2692, %v2691
    %v2821 = vpack.c.b16 %v2694, %v2693
    %v2822 = vpack.c.b16 %v2696, %v2695
    %v2823 = vpack.c.b16 %v2698, %v2697
    %v2824 = vpack.c.b16 %v2700, %v2699
    %v2825 = vpack.c.b16 %v2702, %v2701
    %v2826 = vpack.c.b16 %v2704, %v2703
    %v2827 = vpack.c.b16 %v2706, %v2705
    %v2828 = vpack.c.b16 %v2708, %v2707
    %v2829 = vpack.c.b16 %v2710, %v2709
    %v2830 = vpack.c.b16 %v2712, %v2711
    %v2831 = vpack.c.b16 %v2714, %v2713
    %v2832 = vpack.c.b16 %v2716, %v2715
    %v2833 = vpack.c.b16 %v2718, %v2717
    %v2834 = vpack.c.b16 %v2720, %v2719
    %v2835 = vpack.c.b16 %v2722, %v2721
    %v2836 = vpack.c.b16 %v2724, %v2723
    %v2837 = vpack.c.b16 %v2726, %v2725
    %v2838 = vpack.c.b16 %v2728, %v2727
    %v2839 = vpack.c.b16 %v2730, %v2729
    %v2840 = vpack.c.b16 %v2732, %v2731
    %v2841 = vpack.c.b16 %v2734, %v2733
    %v2842 = vpack.c.b16 %v2736, %v2735
    %v2843 = vpack.c.b16 %v2738, %v2737
    %v2844 = vpack.c.b16 %v2740, %v2739
    %v2845 = vpack.c.b16 %v2742, %v2741
    %v2846 = vpack.c.b16 %v2744, %v2743
    %v2847 = vpack.c.b16 %v2746, %v2745
    %v2848 = vpack.c.b16 %v2748, %v2747
    %v2849 = vpack.c.b16 %v2750, %v2749
    %v2850 = vpack.c.b16 %v2752, %v2751
    %v2851 = vpack.c.b16 %v2754, %v2753
    %v2852 = vpack.c.b16 %v2756, %v2755
    %v2853 = vpack.c.b16 %v2758, %v2757
    %v2854 = vpack.c.b16 %v2760, %v2759
    %v2855 = vpack.c.b16 %v2762, %v2761
    %v2856 = vpack.c.b16 %v2764, %v2763
    %v2857 = vpack.c.b16 %v2766, %v2765
    %v2858 = vpack.c.b16 %v2768, %v2767
    %v2859 = vpack.c.b16 %v2770, %v2769
    %v2860 = vpack.c.b16 %v2772, %v2771
    %v2861 = vpack.c.b16 %v2774, %v2773
    %v2862 = vpack.c.b16 %v2776, %v2775
    %v2863 = vpack.c.b16 %v2778, %v2777
    %v2864 = vpack.c.b16 %v2780, %v2779
    %v2865 = vpack.c.b16 %v2782, %v2781
    %v2866 = vpack.c.b16 %v2784, %v2783
    %v2867 = vpack.c.b16 %v2786, %v2785
    %v2868 = vpack.c.b16 %v2788, %v2787
    %2949 = vmatprep.subr.bf16.mxu0 0
    %2950 = vmatpush1.bf16.msra.mxu0 %v2789
    %2951 = vmatprep.subr.bf16.mxu0 0
    %2952 = vmatpush1.bf16.msra.mxu0 %v2790
    %2953 = vmatprep.subr.bf16.mxu0 0
    %2954 = vmatpush1.bf16.msra.mxu0 %v2791
    %2955 = vmatprep.subr.bf16.mxu0 0
    %2956 = vmatpush1.bf16.msra.mxu0 %v2792
    %2957 = vmatprep.subr.bf16.mxu0 0
    %2958 = vmatpush1.bf16.msra.mxu0 %v2793
    %2959 = vmatprep.subr.bf16.mxu0 0
    %2960 = vmatpush1.bf16.msra.mxu0 %v2794
    %2961 = vmatprep.subr.bf16.mxu0 0
    %2962 = vmatpush1.bf16.msra.mxu0 %v2795
    %2963 = vmatprep.subr.bf16.mxu0 0
    %2964 = vmatpush1.bf16.msra.mxu0 %v2796
    %2965 = vmatprep.subr.bf16.mxu0 0
    %2966 = vmatpush1.bf16.msra.mxu0 %v2797
    %2967 = vmatprep.subr.bf16.mxu0 0
    %2968 = vmatpush1.bf16.msra.mxu0 %v2798
    %2969 = vmatprep.subr.bf16.mxu0 0
    %2970 = vmatpush1.bf16.msra.mxu0 %v2799
    %2971 = vmatprep.subr.bf16.mxu0 0
    %2972 = vmatpush1.bf16.msra.mxu0 %v2800
    %2973 = vmatprep.subr.bf16.mxu0 0
    %2974 = vmatpush1.bf16.msra.mxu0 %v2801
    %2975 = vmatprep.subr.bf16.mxu0 0
    %2976 = vmatpush1.bf16.msra.mxu0 %v2802
    %2977 = vmatprep.subr.bf16.mxu0 0
    %2978 = vmatpush1.bf16.msra.mxu0 %v2803
    %2979 = vmatprep.subr.bf16.mxu0 0
    %2980 = vmatpush1.bf16.msra.mxu0 %v2804
    %2981 = vmatprep.mubr.bf16.mxu0 %v2293
    %2982 = vmatmul.mubr.bf16.gmra.mrb[0].mxu0 %v2292
    %v2983 = vpop.f32.mrb[0].mxu0
    %v2984 = vadd.f32 %v2467, %v2983
    %v2985 = vpop.f32.mrb[0].mxu0
    %v2986 = vpop.f32.mrb[0].mxu0
    %v2987 = vpop.f32.mrb[0].mxu0
    %2988 = vdwg.mxu0
    %2989 = vmatprep.subr.bf16.mxu0 0
    %2990 = vmatpush1.bf16.msra.mxu0 %v2805
    %2991 = vmatprep.subr.bf16.mxu0 0
    %2992 = vmatpush1.bf16.msra.mxu0 %v2806
    %2993 = vmatprep.subr.bf16.mxu0 0
    %2994 = vmatpush1.bf16.msra.mxu0 %v2807
    %2995 = vmatprep.subr.bf16.mxu0 0
    %2996 = vmatpush1.bf16.msra.mxu0 %v2808
    %2997 = vmatprep.subr.bf16.mxu0 0
    %2998 = vmatpush1.bf16.msra.mxu0 %v2809
    %2999 = vmatprep.subr.bf16.mxu0 0
    %3000 = vmatpush1.bf16.msra.mxu0 %v2810
    %3001 = vmatprep.subr.bf16.mxu0 0
    %3002 = vmatpush1.bf16.msra.mxu0 %v2811
    %3003 = vmatprep.subr.bf16.mxu0 0
    %3004 = vmatpush1.bf16.msra.mxu0 %v2812
    %3005 = vmatprep.subr.bf16.mxu0 0
    %3006 = vmatpush1.bf16.msra.mxu0 %v2813
    %3007 = vmatprep.subr.bf16.mxu0 0
    %3008 = vmatpush1.bf16.msra.mxu0 %v2814
    %3009 = vmatprep.subr.bf16.mxu0 0
    %3010 = vmatpush1.bf16.msra.mxu0 %v2815
    %3011 = vmatprep.subr.bf16.mxu0 0
    %3012 = vmatpush1.bf16.msra.mxu0 %v2816
    %3013 = vmatprep.subr.bf16.mxu0 0
    %3014 = vmatpush1.bf16.msra.mxu0 %v2817
    %3015 = vmatprep.subr.bf16.mxu0 0
    %3016 = vmatpush1.bf16.msra.mxu0 %v2818
    %3017 = vmatprep.subr.bf16.mxu0 0
    %3018 = vmatpush1.bf16.msra.mxu0 %v2819
    %3019 = vmatprep.subr.bf16.mxu0 0
    %3020 = vmatpush1.bf16.msra.mxu0 %v2820
    %3021 = vmatprep.mubr.bf16.mxu0 %v2295
    %3022 = vmatmul.mubr.bf16.gmra.mrb[0].mxu0 %v2294
    %v3023 = vpop.f32.mrb[0].mxu0
    %v3024 = vadd.f32 %v2984, %v3023
    %v3025 = vpop.f32.mrb[0].mxu0
    %v3026 = vpop.f32.mrb[0].mxu0
    %v3027 = vpop.f32.mrb[0].mxu0
    %3028 = vdwg.mxu0
    %3029 = vmatprep.subr.bf16.mxu0 0
    %3030 = vmatpush1.bf16.msra.mxu0 %v2821
    %3031 = vmatprep.subr.bf16.mxu0 0
    %3032 = vmatpush1.bf16.msra.mxu0 %v2822
    %3033 = vmatprep.subr.bf16.mxu0 0
    %3034 = vmatpush1.bf16.msra.mxu0 %v2823
    %3035 = vmatprep.subr.bf16.mxu0 0
    %3036 = vmatpush1.bf16.msra.mxu0 %v2824
    %3037 = vmatprep.subr.bf16.mxu0 0
    %3038 = vmatpush1.bf16.msra.mxu0 %v2825
    %3039 = vmatprep.subr.bf16.mxu0 0
    %3040 = vmatpush1.bf16.msra.mxu0 %v2826
    %3041 = vmatprep.subr.bf16.mxu0 0
    %3042 = vmatpush1.bf16.msra.mxu0 %v2827
    %3043 = vmatprep.subr.bf16.mxu0 0
    %3044 = vmatpush1.bf16.msra.mxu0 %v2828
    %3045 = vmatprep.subr.bf16.mxu0 0
    %3046 = vmatpush1.bf16.msra.mxu0 %v2829
    %3047 = vmatprep.subr.bf16.mxu0 0
    %3048 = vmatpush1.bf16.msra.mxu0 %v2830
    %3049 = vmatprep.subr.bf16.mxu0 0
    %3050 = vmatpush1.bf16.msra.mxu0 %v2831
    %3051 = vmatprep.subr.bf16.mxu0 0
    %3052 = vmatpush1.bf16.msra.mxu0 %v2832
    %3053 = vmatprep.subr.bf16.mxu0 0
    %3054 = vmatpush1.bf16.msra.mxu0 %v2833
    %3055 = vmatprep.subr.bf16.mxu0 0
    %3056 = vmatpush1.bf16.msra.mxu0 %v2834
    %3057 = vmatprep.subr.bf16.mxu0 0
    %3058 = vmatpush1.bf16.msra.mxu0 %v2835
    %3059 = vmatprep.subr.bf16.mxu0 0
    %3060 = vmatpush1.bf16.msra.mxu0 %v2836
    %3061 = vmatprep.mubr.bf16.mxu0 %v2297
    %3062 = vmatmul.mubr.bf16.gmra.mrb[0].mxu0 %v2296
    %v3063 = vpop.f32.mrb[0].mxu0
    %v3064 = vadd.f32 %v3024, %v3063
    %v3065 = vpop.f32.mrb[0].mxu0
    %v3066 = vpop.f32.mrb[0].mxu0
    %v3067 = vpop.f32.mrb[0].mxu0
    %3068 = vdwg.mxu0
    %3069 = vmatprep.subr.bf16.mxu0 0
    %3070 = vmatpush1.bf16.msra.mxu0 %v2837
    %3071 = vmatprep.subr.bf16.mxu0 0
    %3072 = vmatpush1.bf16.msra.mxu0 %v2838
    %3073 = vmatprep.subr.bf16.mxu0 0
    %3074 = vmatpush1.bf16.msra.mxu0 %v2839
    %3075 = vmatprep.subr.bf16.mxu0 0
    %3076 = vmatpush1.bf16.msra.mxu0 %v2840
    %3077 = vmatprep.subr.bf16.mxu0 0
    %3078 = vmatpush1.bf16.msra.mxu0 %v2841
    %3079 = vmatprep.subr.bf16.mxu0 0
    %3080 = vmatpush1.bf16.msra.mxu0 %v2842
    %3081 = vmatprep.subr.bf16.mxu0 0
    %3082 = vmatpush1.bf16.msra.mxu0 %v2843
    %3083 = vmatprep.subr.bf16.mxu0 0
    %3084 = vmatpush1.bf16.msra.mxu0 %v2844
    %3085 = vmatprep.subr.bf16.mxu0 0
    %3086 = vmatpush1.bf16.msra.mxu0 %v2845
    %3087 = vmatprep.subr.bf16.mxu0 0
    %3088 = vmatpush1.bf16.msra.mxu0 %v2846
    %3089 = vmatprep.subr.bf16.mxu0 0
    %3090 = vmatpush1.bf16.msra.mxu0 %v2847
    %3091 = vmatprep.subr.bf16.mxu0 0
    %3092 = vmatpush1.bf16.msra.mxu0 %v2848
    %3093 = vmatprep.subr.bf16.mxu0 0
    %3094 = vmatpush1.bf16.msra.mxu0 %v2849
    %3095 = vmatprep.subr.bf16.mxu0 0
    %3096 = vmatpush1.bf16.msra.mxu0 %v2850
    %3097 = vmatprep.subr.bf16.mxu0 0
    %3098 = vmatpush1.bf16.msra.mxu0 %v2851
    %3099 = vmatprep.subr.bf16.mxu0 0
    %3100 = vmatpush1.bf16.msra.mxu0 %v2852
    %3101 = vmatprep.mubr.bf16.mxu0 %v2299
    %3102 = vmatmul.mubr.bf16.gmra.mrb[0].mxu0 %v2298
    %v3103 = vpop.f32.mrb[0].mxu0
    %v3104 = vadd.f32 %v3064, %v3103
    %v3105 = vpop.f32.mrb[0].mxu0
    %v3106 = vpop.f32.mrb[0].mxu0
    %v3107 = vpop.f32.mrb[0].mxu0
    %3108 = vdwg.mxu0
    %3109 = vmatprep.subr.bf16.mxu0 0
    %3110 = vmatpush1.bf16.msra.mxu0 %v2853
    %3111 = vmatprep.subr.bf16.mxu0 0
    %3112 = vmatpush1.bf16.msra.mxu0 %v2854
    %3113 = vmatprep.subr.bf16.mxu0 0
    %3114 = vmatpush1.bf16.msra.mxu0 %v2855
    %3115 = vmatprep.subr.bf16.mxu0 0
    %3116 = vmatpush1.bf16.msra.mxu0 %v2856
    %3117 = vmatprep.subr.bf16.mxu0 0
    %3118 = vmatpush1.bf16.msra.mxu0 %v2857
    %3119 = vmatprep.subr.bf16.mxu0 0
    %3120 = vmatpush1.bf16.msra.mxu0 %v2858
    %3121 = vmatprep.subr.bf16.mxu0 0
    %3122 = vmatpush1.bf16.msra.mxu0 %v2859
    %3123 = vmatprep.subr.bf16.mxu0 0
    %3124 = vmatpush1.bf16.msra.mxu0 %v2860
    %3125 = vmatprep.subr.bf16.mxu0 0
    %3126 = vmatpush1.bf16.msra.mxu0 %v2861
    %3127 = vmatprep.subr.bf16.mxu0 0
    %3128 = vmatpush1.bf16.msra.mxu0 %v2862
    %3129 = vmatprep.subr.bf16.mxu0 0
    %3130 = vmatpush1.bf16.msra.mxu0 %v2863
    %3131 = vmatprep.subr.bf16.mxu0 0
    %3132 = vmatpush1.bf16.msra.mxu0 %v2864
    %3133 = vmatprep.subr.bf16.mxu0 0
    %3134 = vmatpush1.bf16.msra.mxu0 %v2865
    %3135 = vmatprep.subr.bf16.mxu0 0
    %3136 = vmatpush1.bf16.msra.mxu0 %v2866
    %3137 = vmatprep.subr.bf16.mxu0 0
    %3138 = vmatpush1.bf16.msra.mxu0 %v2867
    %3139 = vmatprep.subr.bf16.mxu0 0
    %3140 = vmatpush1.bf16.msra.mxu0 %v2868
    %3141 = vmatprep.mubr.bf16.mxu0 %v2301
    %3142 = vmatmul.mubr.bf16.gmra.mrb[0].mxu0 %v2300
    %v3143 = vpop.f32.mrb[0].mxu0
    %v3144 = vadd.f32 %v3104, %v3143
    %v3145 = vpop.f32.mrb[0].mxu0
    %v3146 = vpop.f32.mrb[0].mxu0
    %v3147 = vpop.f32.mrb[0].mxu0
    %3148 = vdwg.mxu0
    %vm3149 = vcmask 74752
    %v3150 = vsel %vm3149, %v3144, -inf
    %3151 = vmax.xlane.f32.xlu0 %v3150
    %v3152 = vpop.xlane.xlu0 %3151
    %v3153 = vsub.f32 %v3144, %v3152
    %v3154 = vmul.f32 %v3153, 1.442695
    %v3155 = vpow.pop %v3154
    %v3156 = vsel %vm3149, %v3155, 0.0
    %3157 = vadd.xlane.f32.xlu0 %v3156
    %v3158 = vpop.xlane.xlu0 %3157
    %v3159 = vlog2.pop %v3158
    %v3160 = vmul.f32 %v3159, 0.6931472
    %v3161 = vsub.f32 %v3153, %v3160
    %3162 = vst.msk [vmem:[#allocation7] sm:$0x3] %vm3149, %v3161
    // Predicated region
    $region38: #{tpu_custom_call.1} parent=1 // pred_check
      _
    $region39: #{tpu_custom_call.1} parent=1 // pred_check_branch
      %3164 = sbr.rel (0) target = $region41
    $region40: #{tpu_custom_call.1} parent=1 // pred_region
      %s3166 = ssub.s32 32, 32
      %3167 = vsyncadd [#allocation4], %s3166
      %s3169 = sshll.u32 [#allocation7], 4
      %s3170 = int_to_ptr.vmem [resolvable:$true] %s3169
      %3172 = dma.vmem_to_hbm [thread:$0]  %s3170, 32, %s7, [#allocation4]
    $region41: #{tpu_custom_call.1} parent=1 // pred_fallthru
      _
    // Predicated region
    $region42: #{tpu_custom_call.1} parent=1 // pred_check
      _
    $region43: #{tpu_custom_call.1} parent=1 // pred_check_branch
      %3174 = sbr.rel (0) target = $region45
    $region44: #{tpu_custom_call.1} parent=1 // pred_region
      %3175 = dma.done [#allocation4], 32
    $region45: #{tpu_custom_call.1} parent=1 // pred_fallthru
      _
    %3176 = vsyncpa [#allocation3], 1
    %3177 = vsyncpa [#allocation6], 1
    %3178 = vsyncpa [#allocation4], 1

</llo_original>
